<compile_context>
chip_gen: v7x
topology: tpu7x:2x2x1
jax: 0.10.0
libtpu: 0.0.40
codegen_flags: <defaults>
</compile_context>

<pallas_src>
import math
import functools

import jax
import jax.numpy as jnp
from jax.experimental import pallas as pl
from jax.experimental.pallas import tpu as pltpu


def _mha_mix_kernel(q_ref, k_ref, wqt_ref, bq_ref, wkt_ref, bk_ref,
                    v0_ref, v1_ref, o_ref, *, h, d_k):
    """One batch element per grid step; all h heads handled in-kernel."""
    q = q_ref[0].astype(jnp.float32)          # (Lq, D)
    k = k_ref[0].astype(jnp.float32)          # (Lk, D)
    wqt = wqt_ref[...]                        # (D, D)  = Wq^T
    wkt = wkt_ref[...]                        # (D, D)  = Wk^T
    bq = bq_ref[...]                          # (1, D)
    bk = bk_ref[...]                          # (1, D)

    # Fused projections: one full-width MXU matmul per operand (nn.Linear).
    qh_all = jnp.dot(q, wqt, preferred_element_type=jnp.float32) + bq   # (Lq, D)
    kh_all = jnp.dot(k, wkt, preferred_element_type=jnp.float32) + bk   # (Lk, D)

    v0_row = v0_ref[0]                        # (1, Lk)  lane-major
    v1_col = v1_ref[0]                        # (Lq, 1)  column

    inv_sqrt_dk = 1.0 / math.sqrt(d_k)
    inv_h = 1.0 / h

    acc = jnp.zeros(o_ref.shape[1:], jnp.float32)     # (Lq, Lk), lives in vregs

    for hd in range(h):                       # statically unrolled (h small)
        lo = hd * d_k
        qh = qh_all[:, lo:lo + d_k]           # (Lq, d_k) static lane slice
        kh = kh_all[:, lo:lo + d_k]           # (Lk, d_k)

        # scores = qh @ kh^T, contracting last dims directly (no XLU transpose).
        scores = jax.lax.dot_general(
            qh, kh, (((1,), (1,)), ((), ())),
            preferred_element_type=jnp.float32) * inv_sqrt_dk        # (Lq, Lk)

        # Max-stabilized softmax; normalization folded into the small vectors
        # below so the full (Lq, Lk) tile is never divided/rescaled.
        m = jnp.max(scores, axis=-1, keepdims=True)                  # (Lq, 1)
        p = jnp.exp(scores - m)                                      # (Lq, Lk) EUP
        l = jnp.sum(p, axis=-1, keepdims=True)                       # (Lq, 1)
        inv_l = 1.0 / l      # exact; tiny vector, full-tile divide already avoided

        # x0 = attn @ v0            -> per-row weighted sum (VPU mul + lane reduce)
        # x1^T = v1^T @ attn        -> per-col weighted sum (VPU mul + sublane reduce)
        x0 = inv_l * jnp.sum(p * v0_row, axis=-1, keepdims=True)     # (Lq, 1)
        x1t = jnp.sum(p * (v1_col * inv_l), axis=0, keepdims=True)   # (1, Lk)

        # mask_similarity contribution: rank-1 outer product on the VPU.
        acc = acc + x0 * x1t                                         # (Lq, Lk)

    o_ref[0] = inv_h * acc


def multi_headed_attention_mix(query, key, value0, value1,
                               wq, bq, wk, bk, *, h):
    """query: (B, Lq, D), key: (B, Lk, D), value0: (B, Lk), value1: (B, Lq).
    wq/wk: nn.Linear weights (D, D) [out, in]; bq/bk: (D,).
    Returns (B, Lq, Lk) float32."""
    B, Lq, D = query.shape
    _, Lk, _ = key.shape
    assert D % h == 0
    d_k = D // h

    wq_t = wq.T                                   # (D, D): y = x @ W^T + b
    wk_t = wk.T
    bq2 = bq.reshape(1, D)
    bk2 = bk.reshape(1, D)
    v0 = value0.reshape(B, 1, Lk).astype(jnp.float32)   # lane-major row
    v1 = value1.reshape(B, Lq, 1).astype(jnp.float32)   # column

    kernel = functools.partial(_mha_mix_kernel, h=h, d_k=d_k)

    return pl.pallas_call(
        kernel,
        out_shape=jax.ShapeDtypeStruct((B, Lq, Lk), jnp.float32),
        grid_spec=pltpu.PrefetchScalarGridSpec(
            num_scalar_prefetch=0,
            grid=(B,),
            in_specs=[
                pl.BlockSpec((1, Lq, D), lambda b: (b, 0, 0)),   # query
                pl.BlockSpec((1, Lk, D), lambda b: (b, 0, 0)),   # key
                pl.BlockSpec((D, D), lambda b: (0, 0)),          # Wq^T (resident)
                pl.BlockSpec((1, D), lambda b: (0, 0)),          # bq   (resident)
                pl.BlockSpec((D, D), lambda b: (0, 0)),          # Wk^T (resident)
                pl.BlockSpec((1, D), lambda b: (0, 0)),          # bk   (resident)
                pl.BlockSpec((1, 1, Lk), lambda b: (b, 0, 0)),   # value0 row
                pl.BlockSpec((1, Lq, 1), lambda b: (b, 0, 0)),   # value1 col
            ],
            out_specs=pl.BlockSpec((1, Lq, Lk), lambda b: (b, 0, 0)),
        ),
        compiler_params=pltpu.CompilerParams(
            dimension_semantics=("parallel",)),
    )(query, key, wq_t, bq2, wk_t, bk2, v0, v1)


def _reference(query, key, value0, value1, wq, bq, wk, bk, *, h):
    """Pure-JAX reference mirroring the PyTorch forward (eval mode)."""
    B, Lq, D = query.shape
    _, Lk, _ = key.shape
    d_k = D // h
    q = (query @ wq.T + bq).reshape(B, Lq, h, d_k).transpose(0, 2, 1, 3)
    k = (key @ wk.T + bk).reshape(B, Lk, h, d_k).transpose(0, 2, 1, 3)
    scores = jnp.einsum('bhqd,bhkd->bhqk', q, k) / math.sqrt(d_k)
    attn = jax.nn.softmax(scores, axis=-1)                      # (B,h,Lq,Lk)
    v0 = jnp.broadcast_to(value0[:, None, :, None], (B, h, Lk, 1))
    v1 = jnp.broadcast_to(value1[:, None, :, None], (B, h, Lq, 1))
    x0 = attn @ v0                                              # (B,h,Lq,1)
    x1 = jnp.swapaxes(attn, -1, -2) @ v1                        # (B,h,Lk,1)
    sim = x0 @ jnp.swapaxes(x1, -1, -2)                         # (B,h,Lq,Lk)
    return jnp.mean(sim, axis=-3)


if __name__ == "__main__":
    # Small shapes consistent with the module: h=4 heads, d_model=32, seq=16.
    B, Lq, Lk, H, D = 2, 16, 16, 4, 32

    key0 = jax.random.PRNGKey(0)
    ks = jax.random.split(key0, 8)
    bound = 1.0 / math.sqrt(D)   # nn.Linear default init range

    query = jax.random.normal(ks[0], (B, Lq, D), dtype=jnp.float32)
    key_in = jax.random.normal(ks[1], (B, Lk, D), dtype=jnp.float32)
    value0 = jax.random.normal(ks[2], (B, Lk), dtype=jnp.float32)
    value1 = jax.random.normal(ks[3], (B, Lq), dtype=jnp.float32)

    wq = jax.random.uniform(ks[4], (D, D), jnp.float32, -bound, bound)
    bq = jax.random.uniform(ks[5], (D,), jnp.float32, -bound, bound)
    wk = jax.random.uniform(ks[6], (D, D), jnp.float32, -bound, bound)
    bk = jax.random.uniform(ks[7], (D,), jnp.float32, -bound, bound)

    out = multi_headed_attention_mix(query, key_in, value0, value1,
                                     wq, bq, wk, bk, h=H)
    out = jax.block_until_ready(out)

    ref = _reference(query, key_in, value0, value1, wq, bq, wk, bk, h=H)
    assert out.shape == (B, Lq, Lk)
    assert jnp.allclose(out, ref, atol=1e-5, rtol=1e-5), (
        float(jnp.max(jnp.abs(out - ref))))

    print("KERNEL_OK")
</pallas_src>

<mosaic_0001>
module attributes {stable_mosaic.version = 11 : i64} {
  func.func @_mha_mix_kernel(%arg0: i32, %arg1: memref<1x16x32xf32, #tpu.memory_space<vmem>>, %arg2: memref<1x16x32xf32, #tpu.memory_space<vmem>>, %arg3: memref<32x32xf32, #tpu.memory_space<vmem>>, %arg4: memref<1x32xf32, #tpu.memory_space<vmem>>, %arg5: memref<32x32xf32, #tpu.memory_space<vmem>>, %arg6: memref<1x32xf32, #tpu.memory_space<vmem>>, %arg7: memref<1x1x16xf32, #tpu.memory_space<vmem>>, %arg8: memref<1x16x1xf32, #tpu.memory_space<vmem>>, %arg9: memref<1x16x16xf32, #tpu.memory_space<vmem>>) attributes {dimension_semantics = [#tpu.dimension_semantics<parallel>], iteration_bounds = array<i64: 2>, scalar_prefetch = 0 : i64, scratch_operands = 0 : i64, tpu.core_type = #tpu.core_type<tc>, window_params = [{transform_indices = @transform_0, window_bounds = array<i64: 1, 16, 32>}, {transform_indices = @transform_1, window_bounds = array<i64: 1, 16, 32>}, {pipeline_mode = #tpu.pipeline_mode<synchronous>, transform_indices = @transform_2, window_bounds = array<i64: 32, 32>}, {pipeline_mode = #tpu.pipeline_mode<synchronous>, transform_indices = @transform_3, window_bounds = array<i64: 1, 32>}, {pipeline_mode = #tpu.pipeline_mode<synchronous>, transform_indices = @transform_4, window_bounds = array<i64: 32, 32>}, {pipeline_mode = #tpu.pipeline_mode<synchronous>, transform_indices = @transform_5, window_bounds = array<i64: 1, 32>}, {transform_indices = @transform_6, window_bounds = array<i64: 1, 1, 16>}, {transform_indices = @transform_7, window_bounds = array<i64: 1, 16, 1>}, {transform_indices = @transform_8, window_bounds = array<i64: 1, 16, 16>}]} {
    %c0 = arith.constant 0 : index
    %c0_0 = arith.constant 0 : index
    %c0_1 = arith.constant 0 : index
    %0 = vector.load %arg1[%c0, %c0_0, %c0_1] : memref<1x16x32xf32, #tpu.memory_space<vmem>>, vector<1x16x32xf32>
    %1 = vector.shape_cast %0 : vector<1x16x32xf32> to vector<16x32xf32>
    %c0_2 = arith.constant 0 : index
    %c0_3 = arith.constant 0 : index
    %c0_4 = arith.constant 0 : index
    %2 = vector.load %arg2[%c0_2, %c0_3, %c0_4] : memref<1x16x32xf32, #tpu.memory_space<vmem>>, vector<1x16x32xf32>
    %3 = vector.shape_cast %2 : vector<1x16x32xf32> to vector<16x32xf32>
    %c0_5 = arith.constant 0 : index
    %c0_6 = arith.constant 0 : index
    %4 = vector.load %arg3[%c0_5, %c0_6] : memref<32x32xf32, #tpu.memory_space<vmem>>, vector<32x32xf32>
    %c0_7 = arith.constant 0 : index
    %c0_8 = arith.constant 0 : index
    %5 = vector.load %arg5[%c0_7, %c0_8] : memref<32x32xf32, #tpu.memory_space<vmem>>, vector<32x32xf32>
    %c0_9 = arith.constant 0 : index
    %c0_10 = arith.constant 0 : index
    %6 = vector.load %arg4[%c0_9, %c0_10] : memref<1x32xf32, #tpu.memory_space<vmem>>, vector<1x32xf32>
    %c0_11 = arith.constant 0 : index
    %c0_12 = arith.constant 0 : index
    %7 = vector.load %arg6[%c0_11, %c0_12] : memref<1x32xf32, #tpu.memory_space<vmem>>, vector<1x32xf32>
    %cst = arith.constant dense<0.000000e+00> : vector<16x32xf32>
    %8 = tpu.matmul %1, %4, %cst {dimension_numbers = #tpu.dot_dimension_numbers<[1], [0], [0], [1], [0, 0, 1, 1], [], []>} : vector<16x32xf32>, vector<32x32xf32>, vector<16x32xf32> -> vector<16x32xf32>
    %9 = vector.broadcast %6 : vector<1x32xf32> to vector<16x32xf32>
    %10 = arith.addf %8, %9 : vector<16x32xf32>
    %cst_13 = arith.constant dense<0.000000e+00> : vector<16x32xf32>
    %11 = tpu.matmul %3, %5, %cst_13 {dimension_numbers = #tpu.dot_dimension_numbers<[1], [0], [0], [1], [0, 0, 1, 1], [], []>} : vector<16x32xf32>, vector<32x32xf32>, vector<16x32xf32> -> vector<16x32xf32>
    %12 = vector.broadcast %7 : vector<1x32xf32> to vector<16x32xf32>
    %13 = arith.addf %11, %12 : vector<16x32xf32>
    %c0_14 = arith.constant 0 : index
    %c0_15 = arith.constant 0 : index
    %c0_16 = arith.constant 0 : index
    %14 = vector.load %arg7[%c0_14, %c0_15, %c0_16] : memref<1x1x16xf32, #tpu.memory_space<vmem>>, vector<1x1x16xf32>
    %15 = vector.shape_cast %14 : vector<1x1x16xf32> to vector<1x16xf32>
    %c0_17 = arith.constant 0 : index
    %c0_18 = arith.constant 0 : index
    %c0_19 = arith.constant 0 : index
    %16 = vector.load %arg8[%c0_17, %c0_18, %c0_19] : memref<1x16x1xf32, #tpu.memory_space<vmem>>, vector<1x16x1xf32>
    %17 = vector.shape_cast %16 : vector<1x16x1xf32> to vector<16x1xf32>
    %cst_20 = arith.constant 0.000000e+00 : f32
    %18 = vector.broadcast %cst_20 : f32 to vector<16x16xf32>
    %19 = vector.extract_strided_slice %10 {offsets = [0, 0], sizes = [16, 8], strides = [1, 1]} : vector<16x32xf32> to vector<16x8xf32>
    %20 = vector.extract_strided_slice %13 {offsets = [0, 0], sizes = [16, 8], strides = [1, 1]} : vector<16x32xf32> to vector<16x8xf32>
    %cst_21 = arith.constant dense<0.000000e+00> : vector<16x16xf32>
    %21 = tpu.matmul %19, %20, %cst_21 {dimension_numbers = #tpu.dot_dimension_numbers<[1], [1], [0], [0], [0, 0, 1, 0], [], []>} : vector<16x8xf32>, vector<16x8xf32>, vector<16x16xf32> -> vector<16x16xf32>
    %cst_22 = arith.constant 0.353553385 : f32
    %22 = vector.broadcast %cst_22 : f32 to vector<16x16xf32>
    %23 = arith.mulf %21, %22 : vector<16x16xf32>
    %cst_23 = arith.constant dense<0xFF800000> : vector<16xf32>
    %24 = vector.multi_reduction <maximumf>, %23, %cst_23 [1] : vector<16x16xf32> to vector<16xf32>
    %25 = vector.shape_cast %24 : vector<16xf32> to vector<16x1xf32>
    %26 = vector.broadcast %25 : vector<16x1xf32> to vector<16x16xf32>
    %27 = arith.subf %23, %26 : vector<16x16xf32>
    %28 = math.exp %27 : vector<16x16xf32>
    %cst_24 = arith.constant dense<0.000000e+00> : vector<16xf32>
    %29 = vector.multi_reduction <add>, %28, %cst_24 [1] : vector<16x16xf32> to vector<16xf32>
    %30 = vector.shape_cast %29 : vector<16xf32> to vector<16x1xf32>
    %cst_25 = arith.constant 1.000000e+00 : f32
    %31 = vector.broadcast %cst_25 : f32 to vector<16x1xf32>
    %32 = arith.divf %31, %30 : vector<16x1xf32>
    %33 = vector.broadcast %15 : vector<1x16xf32> to vector<16x16xf32>
    %34 = arith.mulf %28, %33 : vector<16x16xf32>
    %cst_26 = arith.constant dense<0.000000e+00> : vector<16xf32>
    %35 = vector.multi_reduction <add>, %34, %cst_26 [1] : vector<16x16xf32> to vector<16xf32>
    %36 = vector.shape_cast %35 : vector<16xf32> to vector<16x1xf32>
    %37 = arith.mulf %32, %36 : vector<16x1xf32>
    %38 = arith.mulf %17, %32 : vector<16x1xf32>
    %39 = vector.broadcast %38 : vector<16x1xf32> to vector<16x16xf32>
    %40 = arith.mulf %28, %39 : vector<16x16xf32>
    %cst_27 = arith.constant dense<0.000000e+00> : vector<16xf32>
    %41 = vector.multi_reduction <add>, %40, %cst_27 [0] : vector<16x16xf32> to vector<16xf32>
    %42 = vector.shape_cast %41 : vector<16xf32> to vector<1x16xf32>
    %43 = vector.broadcast %37 : vector<16x1xf32> to vector<16x16xf32>
    %44 = vector.broadcast %42 : vector<1x16xf32> to vector<16x16xf32>
    %45 = arith.mulf %43, %44 : vector<16x16xf32>
    %46 = arith.addf %18, %45 : vector<16x16xf32>
    %47 = vector.extract_strided_slice %10 {offsets = [0, 8], sizes = [16, 8], strides = [1, 1]} : vector<16x32xf32> to vector<16x8xf32>
    %48 = vector.extract_strided_slice %13 {offsets = [0, 8], sizes = [16, 8], strides = [1, 1]} : vector<16x32xf32> to vector<16x8xf32>
    %cst_28 = arith.constant dense<0.000000e+00> : vector<16x16xf32>
    %49 = tpu.matmul %47, %48, %cst_28 {dimension_numbers = #tpu.dot_dimension_numbers<[1], [1], [0], [0], [0, 0, 1, 0], [], []>} : vector<16x8xf32>, vector<16x8xf32>, vector<16x16xf32> -> vector<16x16xf32>
    %cst_29 = arith.constant 0.353553385 : f32
    %50 = vector.broadcast %cst_29 : f32 to vector<16x16xf32>
    %51 = arith.mulf %49, %50 : vector<16x16xf32>
    %cst_30 = arith.constant dense<0xFF800000> : vector<16xf32>
    %52 = vector.multi_reduction <maximumf>, %51, %cst_30 [1] : vector<16x16xf32> to vector<16xf32>
    %53 = vector.shape_cast %52 : vector<16xf32> to vector<16x1xf32>
    %54 = vector.broadcast %53 : vector<16x1xf32> to vector<16x16xf32>
    %55 = arith.subf %51, %54 : vector<16x16xf32>
    %56 = math.exp %55 : vector<16x16xf32>
    %cst_31 = arith.constant dense<0.000000e+00> : vector<16xf32>
    %57 = vector.multi_reduction <add>, %56, %cst_31 [1] : vector<16x16xf32> to vector<16xf32>
    %58 = vector.shape_cast %57 : vector<16xf32> to vector<16x1xf32>
    %cst_32 = arith.constant 1.000000e+00 : f32
    %59 = vector.broadcast %cst_32 : f32 to vector<16x1xf32>
    %60 = arith.divf %59, %58 : vector<16x1xf32>
    %61 = vector.broadcast %15 : vector<1x16xf32> to vector<16x16xf32>
    %62 = arith.mulf %56, %61 : vector<16x16xf32>
    %cst_33 = arith.constant dense<0.000000e+00> : vector<16xf32>
    %63 = vector.multi_reduction <add>, %62, %cst_33 [1] : vector<16x16xf32> to vector<16xf32>
    %64 = vector.shape_cast %63 : vector<16xf32> to vector<16x1xf32>
    %65 = arith.mulf %60, %64 : vector<16x1xf32>
    %66 = arith.mulf %17, %60 : vector<16x1xf32>
    %67 = vector.broadcast %66 : vector<16x1xf32> to vector<16x16xf32>
    %68 = arith.mulf %56, %67 : vector<16x16xf32>
    %cst_34 = arith.constant dense<0.000000e+00> : vector<16xf32>
    %69 = vector.multi_reduction <add>, %68, %cst_34 [0] : vector<16x16xf32> to vector<16xf32>
    %70 = vector.shape_cast %69 : vector<16xf32> to vector<1x16xf32>
    %71 = vector.broadcast %65 : vector<16x1xf32> to vector<16x16xf32>
    %72 = vector.broadcast %70 : vector<1x16xf32> to vector<16x16xf32>
    %73 = arith.mulf %71, %72 : vector<16x16xf32>
    %74 = arith.addf %46, %73 : vector<16x16xf32>
    %75 = vector.extract_strided_slice %10 {offsets = [0, 16], sizes = [16, 8], strides = [1, 1]} : vector<16x32xf32> to vector<16x8xf32>
    %76 = vector.extract_strided_slice %13 {offsets = [0, 16], sizes = [16, 8], strides = [1, 1]} : vector<16x32xf32> to vector<16x8xf32>
    %cst_35 = arith.constant dense<0.000000e+00> : vector<16x16xf32>
    %77 = tpu.matmul %75, %76, %cst_35 {dimension_numbers = #tpu.dot_dimension_numbers<[1], [1], [0], [0], [0, 0, 1, 0], [], []>} : vector<16x8xf32>, vector<16x8xf32>, vector<16x16xf32> -> vector<16x16xf32>
    %cst_36 = arith.constant 0.353553385 : f32
    %78 = vector.broadcast %cst_36 : f32 to vector<16x16xf32>
    %79 = arith.mulf %77, %78 : vector<16x16xf32>
    %cst_37 = arith.constant dense<0xFF800000> : vector<16xf32>
    %80 = vector.multi_reduction <maximumf>, %79, %cst_37 [1] : vector<16x16xf32> to vector<16xf32>
    %81 = vector.shape_cast %80 : vector<16xf32> to vector<16x1xf32>
    %82 = vector.broadcast %81 : vector<16x1xf32> to vector<16x16xf32>
    %83 = arith.subf %79, %82 : vector<16x16xf32>
    %84 = math.exp %83 : vector<16x16xf32>
    %cst_38 = arith.constant dense<0.000000e+00> : vector<16xf32>
    %85 = vector.multi_reduction <add>, %84, %cst_38 [1] : vector<16x16xf32> to vector<16xf32>
    %86 = vector.shape_cast %85 : vector<16xf32> to vector<16x1xf32>
    %cst_39 = arith.constant 1.000000e+00 : f32
    %87 = vector.broadcast %cst_39 : f32 to vector<16x1xf32>
    %88 = arith.divf %87, %86 : vector<16x1xf32>
    %89 = vector.broadcast %15 : vector<1x16xf32> to vector<16x16xf32>
    %90 = arith.mulf %84, %89 : vector<16x16xf32>
    %cst_40 = arith.constant dense<0.000000e+00> : vector<16xf32>
    %91 = vector.multi_reduction <add>, %90, %cst_40 [1] : vector<16x16xf32> to vector<16xf32>
    %92 = vector.shape_cast %91 : vector<16xf32> to vector<16x1xf32>
    %93 = arith.mulf %88, %92 : vector<16x1xf32>
    %94 = arith.mulf %17, %88 : vector<16x1xf32>
    %95 = vector.broadcast %94 : vector<16x1xf32> to vector<16x16xf32>
    %96 = arith.mulf %84, %95 : vector<16x16xf32>
    %cst_41 = arith.constant dense<0.000000e+00> : vector<16xf32>
    %97 = vector.multi_reduction <add>, %96, %cst_41 [0] : vector<16x16xf32> to vector<16xf32>
    %98 = vector.shape_cast %97 : vector<16xf32> to vector<1x16xf32>
    %99 = vector.broadcast %93 : vector<16x1xf32> to vector<16x16xf32>
    %100 = vector.broadcast %98 : vector<1x16xf32> to vector<16x16xf32>
    %101 = arith.mulf %99, %100 : vector<16x16xf32>
    %102 = arith.addf %74, %101 : vector<16x16xf32>
    %103 = vector.extract_strided_slice %10 {offsets = [0, 24], sizes = [16, 8], strides = [1, 1]} : vector<16x32xf32> to vector<16x8xf32>
    %104 = vector.extract_strided_slice %13 {offsets = [0, 24], sizes = [16, 8], strides = [1, 1]} : vector<16x32xf32> to vector<16x8xf32>
    %cst_42 = arith.constant dense<0.000000e+00> : vector<16x16xf32>
    %105 = tpu.matmul %103, %104, %cst_42 {dimension_numbers = #tpu.dot_dimension_numbers<[1], [1], [0], [0], [0, 0, 1, 0], [], []>} : vector<16x8xf32>, vector<16x8xf32>, vector<16x16xf32> -> vector<16x16xf32>
    %cst_43 = arith.constant 0.353553385 : f32
    %106 = vector.broadcast %cst_43 : f32 to vector<16x16xf32>
    %107 = arith.mulf %105, %106 : vector<16x16xf32>
    %cst_44 = arith.constant dense<0xFF800000> : vector<16xf32>
    %108 = vector.multi_reduction <maximumf>, %107, %cst_44 [1] : vector<16x16xf32> to vector<16xf32>
    %109 = vector.shape_cast %108 : vector<16xf32> to vector<16x1xf32>
    %110 = vector.broadcast %109 : vector<16x1xf32> to vector<16x16xf32>
    %111 = arith.subf %107, %110 : vector<16x16xf32>
    %112 = math.exp %111 : vector<16x16xf32>
    %cst_45 = arith.constant dense<0.000000e+00> : vector<16xf32>
    %113 = vector.multi_reduction <add>, %112, %cst_45 [1] : vector<16x16xf32> to vector<16xf32>
    %114 = vector.shape_cast %113 : vector<16xf32> to vector<16x1xf32>
    %cst_46 = arith.constant 1.000000e+00 : f32
    %115 = vector.broadcast %cst_46 : f32 to vector<16x1xf32>
    %116 = arith.divf %115, %114 : vector<16x1xf32>
    %117 = vector.broadcast %15 : vector<1x16xf32> to vector<16x16xf32>
    %118 = arith.mulf %112, %117 : vector<16x16xf32>
    %cst_47 = arith.constant dense<0.000000e+00> : vector<16xf32>
    %119 = vector.multi_reduction <add>, %118, %cst_47 [1] : vector<16x16xf32> to vector<16xf32>
    %120 = vector.shape_cast %119 : vector<16xf32> to vector<16x1xf32>
    %121 = arith.mulf %116, %120 : vector<16x1xf32>
    %122 = arith.mulf %17, %116 : vector<16x1xf32>
    %123 = vector.broadcast %122 : vector<16x1xf32> to vector<16x16xf32>
    %124 = arith.mulf %112, %123 : vector<16x16xf32>
    %cst_48 = arith.constant dense<0.000000e+00> : vector<16xf32>
    %125 = vector.multi_reduction <add>, %124, %cst_48 [0] : vector<16x16xf32> to vector<16xf32>
    %126 = vector.shape_cast %125 : vector<16xf32> to vector<1x16xf32>
    %127 = vector.broadcast %121 : vector<16x1xf32> to vector<16x16xf32>
    %128 = vector.broadcast %126 : vector<1x16xf32> to vector<16x16xf32>
    %129 = arith.mulf %127, %128 : vector<16x16xf32>
    %130 = arith.addf %102, %129 : vector<16x16xf32>
    %cst_49 = arith.constant 2.500000e-01 : f32
    %131 = vector.broadcast %cst_49 : f32 to vector<16x16xf32>
    %132 = arith.mulf %131, %130 : vector<16x16xf32>
    %c0_50 = arith.constant 0 : index
    %c0_51 = arith.constant 0 : index
    %c0_52 = arith.constant 0 : index
    %133 = vector.load %arg9[%c0_50, %c0_51, %c0_52] : memref<1x16x16xf32, #tpu.memory_space<vmem>>, vector<1x16x16xf32>
    %134 = vector.shape_cast %133 : vector<1x16x16xf32> to vector<16x16xf32>
    %135 = vector.shape_cast %132 : vector<16x16xf32> to vector<1x16x16xf32>
    tpu.vector_store %arg9[%c0_50, %c0_51, %c0_52], %135 {strides = array<i32>} : memref<1x16x16xf32, #tpu.memory_space<vmem>>, vector<1x16x16xf32>,
    return
  }
  func.func @transform_0(%arg0: i32) -> (i32, i32, i32) {
    %c0_i32 = arith.constant 0 : i32
    %c0_i32_0 = arith.constant 0 : i32
    %c0_i32_1 = arith.constant 0 : i32
    return %arg0, %c0_i32, %c0_i32_0 : i32, i32, i32
  }
  func.func @transform_1(%arg0: i32) -> (i32, i32, i32) {
    %c0_i32 = arith.constant 0 : i32
    %c0_i32_0 = arith.constant 0 : i32
    %c0_i32_1 = arith.constant 0 : i32
    return %arg0, %c0_i32, %c0_i32_0 : i32, i32, i32
  }
  func.func @transform_2(%arg0: i32) -> (i32, i32) {
    %c0_i32 = arith.constant 0 : i32
    %c0_i32_0 = arith.constant 0 : i32
    %c0_i32_1 = arith.constant 0 : i32
    return %c0_i32, %c0_i32_0 : i32, i32
  }
  func.func @transform_3(%arg0: i32) -> (i32, i32) {
    %c0_i32 = arith.constant 0 : i32
    %c0_i32_0 = arith.constant 0 : i32
    %c0_i32_1 = arith.constant 0 : i32
    return %c0_i32, %c0_i32_0 : i32, i32
  }
  func.func @transform_4(%arg0: i32) -> (i32, i32) {
    %c0_i32 = arith.constant 0 : i32
    %c0_i32_0 = arith.constant 0 : i32
    %c0_i32_1 = arith.constant 0 : i32
    return %c0_i32, %c0_i32_0 : i32, i32
  }
  func.func @transform_5(%arg0: i32) -> (i32, i32) {
    %c0_i32 = arith.constant 0 : i32
    %c0_i32_0 = arith.constant 0 : i32
    %c0_i32_1 = arith.constant 0 : i32
    return %c0_i32, %c0_i32_0 : i32, i32
  }
  func.func @transform_6(%arg0: i32) -> (i32, i32, i32) {
    %c0_i32 = arith.constant 0 : i32
    %c0_i32_0 = arith.constant 0 : i32
    %c0_i32_1 = arith.constant 0 : i32
    return %arg0, %c0_i32, %c0_i32_0 : i32, i32, i32
  }
  func.func @transform_7(%arg0: i32) -> (i32, i32, i32) {
    %c0_i32 = arith.constant 0 : i32
    %c0_i32_0 = arith.constant 0 : i32
    %c0_i32_1 = arith.constant 0 : i32
    return %arg0, %c0_i32, %c0_i32_0 : i32, i32, i32
  }
  func.func @transform_8(%arg0: i32) -> (i32, i32, i32) {
    %c0_i32 = arith.constant 0 : i32
    %c0_i32_0 = arith.constant 0 : i32
    %c0_i32_1 = arith.constant 0 : i32
    return %arg0, %c0_i32, %c0_i32_0 : i32, i32, i32
  }
}

</mosaic_0001>

<llo_original>
// kernel: tpu_custom_call.1
$region0: #{tpu_custom_call.1}
  #allocation0 [shape = 'u32[]', space=smem, size = 0x4, offset = 0x4, fixed_abs, tag = 'smem constant byte address 0x4 - core index']
  #allocation1 [shape = 'u32[144,128]{1,0:T(1,128)}', space=vmem, size = 0x12000, scoped, tag = 'internal scratch']
  %s0 = inlined_call_operand.vmem [shape: f32[2,16,32], index: 0, kind: input, shape index: {}]
  %s1 = inlined_call_operand.hbm [shape: f32[2,16,32], index: 1, kind: input, shape index: {}]
  %s2 = inlined_call_operand.hbm [shape: f32[32,32], index: 2, kind: input, shape index: {}]
  %s3 = inlined_call_operand.vmem [shape: f32[1,32], index: 3, kind: input, shape index: {}]
  %s4 = inlined_call_operand.hbm [shape: f32[32,32], index: 4, kind: input, shape index: {}]
  %s5 = inlined_call_operand.vmem [shape: f32[1,32], index: 5, kind: input, shape index: {}]
  %s6 = inlined_call_operand.vmem [shape: f32[2,1,16], index: 6, kind: input, shape index: {}]
  %s7 = inlined_call_operand.vmem [shape: f32[2,16,1], index: 7, kind: input, shape index: {}]
  %s8 = inlined_call_operand.hbm [shape: f32[2,16,16], index: 8, kind: output, shape index: {}]
  %s9 = sld [smem:[#allocation0]]
  $region77: #{tpu_custom_call.1} parent=0
    _
  %s11 = ssub.s32 1, %s9
  %s12 = scalar_select 0, %s11, %s9
  $region1: #{tpu_custom_call.1} parent=0
    #allocation2 [shape = 'u8[16384]{0}', space=vmem, size = 0x4000, scoped, tag = 'input window, operand 1']
    #allocation3 [shape = 's32[2]{0}', space=sflag, size = 0x8, scoped, tag = 'scoped memory for tpu_custom_call.1']
    #allocation4 [shape = 's32[2]{0}', space=sflag, size = 0x8, scoped, tag = 'scoped memory for tpu_custom_call.1']
    #allocation5 [shape = 'u8[16384]{0}', space=vmem, size = 0x4000, scoped, tag = 'input window, operand 2, single buffered']
    #allocation6 [shape = 's32[1]{0}', space=sflag, size = 0x4, scoped, tag = 'scoped memory for tpu_custom_call.1']
    #allocation7 [shape = 'u8[16384]{0}', space=vmem, size = 0x4000, scoped, tag = 'input window, operand 4, single buffered']
    #allocation8 [shape = 'u8[16384]{0}', space=vmem, size = 0x4000, scoped, tag = 'output window, operand 0']
    %13 = vsyncpa [#allocation3], 0
    %s14 = scalar_lea.sflag [#allocation3], 1
    %15 = vsyncpa %s14, 0
    %16 = vsyncpa [#allocation6], 0
    %17 = vsyncpa [#allocation4], 0
    %s18 = scalar_lea.sflag [#allocation4], 1
    %19 = vsyncpa %s18, 0
    loop: start=0, step=1, limit=4
    $region2: #{tpu_custom_call.1} parent=1 // loop_pre_header
      _
    $region3: #{tpu_custom_call.1} parent=1 // loop_header
      %s21 = sphi 0, %s25
      %p22 = scmp.ge.s32.totalorder %s21, 4
      %s31 = sphi 0, %s33
      %s34 = sphi 0, %s31
      %s35 = sphi 0, %s34
      %s51 = sphi 0, %s35
      %s57 = sphi 0, %s59
      %s60 = sphi 0, %s57
      %s61 = sphi 0, %s60
      %s77 = sphi 0, %s61
      %s81 = sphi 0, %s81
      %s83 = sphi 0, %s81
      %s84 = sphi 0, %s83
      %s98 = sphi 0, %s84
      %s102 = sphi 0, %s102
      %s104 = sphi 0, %s102
      %s105 = sphi 0, %s104
      %s119 = sphi 0, %s105
      %s123 = sphi 0, %s123
      %s125 = sphi 0, %s123
      %s126 = sphi 0, %s125
      %s140 = sphi 0, %s126
      %s144 = sphi 0, %s144
      %s146 = sphi 0, %s144
      %s147 = sphi 0, %s146
      %s161 = sphi 0, %s147
      %s167 = sphi 0, %s169
      %s170 = sphi 0, %s167
      %s171 = sphi 0, %s170
      %s187 = sphi 0, %s171
      %s193 = sphi 0, %s195
      %s196 = sphi 0, %s193
      %s197 = sphi 0, %s196
      %s213 = sphi 0, %s197
      %s219 = sphi 0, %s221
      %s222 = sphi 0, %s219
      %s223 = sphi 0, %s222
      %s239 = sphi 0, %s223
    $region4: #{tpu_custom_call.1} parent=1 // loop_header_branch
      %24 = sbr.rel (%p22) target = $region8
    $region5: #{tpu_custom_call.1} parent=1 // loop_body
      %s26 = ssub.s32 %s21, 1
      %s27 = ssub.s32 %s21, 2
      %s28 = sadd.s32 %s21, 1
      %s29 = ssub.s32 %s21, %s28
      %p30 = scmp.eq.s32.totalorder %s29, 0
      %s32 = sadd.s32 %s31, 1
      %s33 = scalar_select %p30, %s31, %s32
      %p36 = pneg %p30
      %p37 = scmp.eq.s32.totalorder %s21, 1
      %p38 = por %p36, %p37
      %p39 = scmp.ne.s32.totalorder %s31, %s34
      %p40 = scmp.eq.s32.totalorder %s21, 0
      %p41 = por %p39, %p40
      %p42 = scmp.ne.s32.totalorder %s31, %s34
      %p43 = scmp.eq.s32.totalorder %s26, 1
      %p44 = por %p42, %p43
      %p45 = scmp.ne.s32.totalorder %s34, %s35
      %p46 = scmp.eq.s32.totalorder %s26, 0
      %p47 = por %p45, %p46
      %p48 = scmp.ne.s32.totalorder %s34, %s35
      %p49 = scmp.eq.s32.totalorder %s27, 1
      %p50 = por %p48, %p49
      %p52 = scmp.ne.s32.totalorder %s35, %s51
      %p53 = scmp.eq.s32.totalorder %s27, 0
      %p54 = por %p52, %p53
      %s55 = ssub.s32 %s21, %s28
      %p56 = scmp.eq.s32.totalorder %s55, 0
      %s58 = sadd.s32 %s57, 1
      %s59 = scalar_select %p56, %s57, %s58
      %p62 = pneg %p56
      %p63 = scmp.eq.s32.totalorder %s21, 1
      %p64 = por %p62, %p63
      %p65 = scmp.ne.s32.totalorder %s57, %s60
      %p66 = scmp.eq.s32.totalorder %s21, 0
      %p67 = por %p65, %p66
      %p68 = scmp.ne.s32.totalorder %s57, %s60
      %p69 = scmp.eq.s32.totalorder %s26, 1
      %p70 = por %p68, %p69
      %p71 = scmp.ne.s32.totalorder %s60, %s61
      %p72 = scmp.eq.s32.totalorder %s26, 0
      %p73 = por %p71, %p72
      %p74 = scmp.ne.s32.totalorder %s60, %s61
      %p75 = scmp.eq.s32.totalorder %s27, 1
      %p76 = por %p74, %p75
      %p78 = scmp.ne.s32.totalorder %s61, %s77
      %p79 = scmp.eq.s32.totalorder %s27, 0
      %p80 = por %p78, %p79
      %s82 = sadd.s32 %s81, 1
      %p85 = scmp.eq.s32.totalorder %s21, 1
      %p86 = scmp.ne.s32.totalorder %s81, %s83
      %p87 = scmp.eq.s32.totalorder %s21, 0
      %p88 = por %p86, %p87
      %p89 = scmp.ne.s32.totalorder %s81, %s83
      %p90 = scmp.eq.s32.totalorder %s26, 1
      %p91 = por %p89, %p90
      %p92 = scmp.ne.s32.totalorder %s83, %s84
      %p93 = scmp.eq.s32.totalorder %s26, 0
      %p94 = por %p92, %p93
      %p95 = scmp.ne.s32.totalorder %s83, %s84
      %p96 = scmp.eq.s32.totalorder %s27, 1
      %p97 = por %p95, %p96
      %p99 = scmp.ne.s32.totalorder %s84, %s98
      %p100 = scmp.eq.s32.totalorder %s27, 0
      %p101 = por %p99, %p100
      %s103 = sadd.s32 %s102, 1
      %p106 = scmp.eq.s32.totalorder %s21, 1
      %p107 = scmp.ne.s32.totalorder %s102, %s104
      %p108 = scmp.eq.s32.totalorder %s21, 0
      %p109 = por %p107, %p108
      %p110 = scmp.ne.s32.totalorder %s102, %s104
      %p111 = scmp.eq.s32.totalorder %s26, 1
      %p112 = por %p110, %p111
      %p113 = scmp.ne.s32.totalorder %s104, %s105
      %p114 = scmp.eq.s32.totalorder %s26, 0
      %p115 = por %p113, %p114
      %p116 = scmp.ne.s32.totalorder %s104, %s105
      %p117 = scmp.eq.s32.totalorder %s27, 1
      %p118 = por %p116, %p117
      %p120 = scmp.ne.s32.totalorder %s105, %s119
      %p121 = scmp.eq.s32.totalorder %s27, 0
      %p122 = por %p120, %p121
      %s124 = sadd.s32 %s123, 1
      %p127 = scmp.eq.s32.totalorder %s21, 1
      %p128 = scmp.ne.s32.totalorder %s123, %s125
      %p129 = scmp.eq.s32.totalorder %s21, 0
      %p130 = por %p128, %p129
      %p131 = scmp.ne.s32.totalorder %s123, %s125
      %p132 = scmp.eq.s32.totalorder %s26, 1
      %p133 = por %p131, %p132
      %p134 = scmp.ne.s32.totalorder %s125, %s126
      %p135 = scmp.eq.s32.totalorder %s26, 0
      %p136 = por %p134, %p135
      %p137 = scmp.ne.s32.totalorder %s125, %s126
      %p138 = scmp.eq.s32.totalorder %s27, 1
      %p139 = por %p137, %p138
      %p141 = scmp.ne.s32.totalorder %s126, %s140
      %p142 = scmp.eq.s32.totalorder %s27, 0
      %p143 = por %p141, %p142
      %s145 = sadd.s32 %s144, 1
      %p148 = scmp.eq.s32.totalorder %s21, 1
      %p149 = scmp.ne.s32.totalorder %s144, %s146
      %p150 = scmp.eq.s32.totalorder %s21, 0
      %p151 = por %p149, %p150
      %p152 = scmp.ne.s32.totalorder %s144, %s146
      %p153 = scmp.eq.s32.totalorder %s26, 1
      %p154 = por %p152, %p153
      %p155 = scmp.ne.s32.totalorder %s146, %s147
      %p156 = scmp.eq.s32.totalorder %s26, 0
      %p157 = por %p155, %p156
      %p158 = scmp.ne.s32.totalorder %s146, %s147
      %p159 = scmp.eq.s32.totalorder %s27, 1
      %p160 = por %p158, %p159
      %p162 = scmp.ne.s32.totalorder %s147, %s161
      %p163 = scmp.eq.s32.totalorder %s27, 0
      %p164 = por %p162, %p163
      %s165 = ssub.s32 %s21, %s28
      %p166 = scmp.eq.s32.totalorder %s165, 0
      %s168 = sadd.s32 %s167, 1
      %s169 = scalar_select %p166, %s167, %s168
      %p172 = pneg %p166
      %p173 = scmp.eq.s32.totalorder %s21, 1
      %p174 = por %p172, %p173
      %p175 = scmp.ne.s32.totalorder %s167, %s170
      %p176 = scmp.eq.s32.totalorder %s21, 0
      %p177 = por %p175, %p176
      %p178 = scmp.ne.s32.totalorder %s167, %s170
      %p179 = scmp.eq.s32.totalorder %s26, 1
      %p180 = por %p178, %p179
      %p181 = scmp.ne.s32.totalorder %s170, %s171
      %p182 = scmp.eq.s32.totalorder %s26, 0
      %p183 = por %p181, %p182
      %p184 = scmp.ne.s32.totalorder %s170, %s171
      %p185 = scmp.eq.s32.totalorder %s27, 1
      %p186 = por %p184, %p185
      %p188 = scmp.ne.s32.totalorder %s171, %s187
      %p189 = scmp.eq.s32.totalorder %s27, 0
      %p190 = por %p188, %p189
      %s191 = ssub.s32 %s21, %s28
      %p192 = scmp.eq.s32.totalorder %s191, 0
      %s194 = sadd.s32 %s193, 1
      %s195 = scalar_select %p192, %s193, %s194
      %p198 = pneg %p192
      %p199 = scmp.eq.s32.totalorder %s21, 1
      %p200 = por %p198, %p199
      %p201 = scmp.ne.s32.totalorder %s193, %s196
      %p202 = scmp.eq.s32.totalorder %s21, 0
      %p203 = por %p201, %p202
      %p204 = scmp.ne.s32.totalorder %s193, %s196
      %p205 = scmp.eq.s32.totalorder %s26, 1
      %p206 = por %p204, %p205
      %p207 = scmp.ne.s32.totalorder %s196, %s197
      %p208 = scmp.eq.s32.totalorder %s26, 0
      %p209 = por %p207, %p208
      %p210 = scmp.ne.s32.totalorder %s196, %s197
      %p211 = scmp.eq.s32.totalorder %s27, 1
      %p212 = por %p210, %p211
      %p214 = scmp.ne.s32.totalorder %s197, %s213
      %p215 = scmp.eq.s32.totalorder %s27, 0
      %p216 = por %p214, %p215
      %s217 = ssub.s32 %s21, %s28
      %p218 = scmp.eq.s32.totalorder %s217, 0
      %s220 = sadd.s32 %s219, 1
      %s221 = scalar_select %p218, %s219, %s220
      %p224 = pneg %p218
      %p225 = scmp.eq.s32.totalorder %s21, 1
      %p226 = por %p224, %p225
      %p227 = scmp.ne.s32.totalorder %s219, %s222
      %p228 = scmp.eq.s32.totalorder %s21, 0
      %p229 = por %p227, %p228
      %p230 = scmp.ne.s32.totalorder %s219, %s222
      %p231 = scmp.eq.s32.totalorder %s26, 1
      %p232 = por %p230, %p231
      %p233 = scmp.ne.s32.totalorder %s222, %s223
      %p234 = scmp.eq.s32.totalorder %s26, 0
      %p235 = por %p233, %p234
      %p236 = scmp.ne.s32.totalorder %s222, %s223
      %p237 = scmp.eq.s32.totalorder %s27, 1
      %p238 = por %p236, %p237
      %p240 = scmp.ne.s32.totalorder %s223, %s239
      %p241 = scmp.eq.s32.totalorder %s27, 0
      %p242 = por %p240, %p241
      %p243 = scmp.le.s32.totalorder 1, %s21
      %p244 = scmp.lt.s32.totalorder %s21, 3
      %p245 = pnand %p243, %p244
      %p246 = pneg %p245
      // Predicated region
      $region9: #{tpu_custom_call.1} parent=5 // pred_check
        _
      $region10: #{tpu_custom_call.1} parent=5 // pred_check_branch
        %248 = sbr.rel (%p245) target = $region12
      $region11: #{tpu_custom_call.1} parent=5 // pred_region
        %s249 = ssub.s32 %s21, 1
        // Predicated region
        $region13: #{tpu_custom_call.1} parent=11 // pred_check
          %p250 = pneg %p94
        $region14: #{tpu_custom_call.1} parent=11 // pred_check_branch
          %252 = sbr.rel (%p250) target = $region16
        $region15: #{tpu_custom_call.1} parent=11 // pred_region
          %s254 = ssub.s32 512, 512
          %255 = vsyncadd [#allocation6], %s254
          %s256 = sshll.u32 [#allocation5], 4
          %s257 = int_to_ptr.vmem [resolvable:$true] %s256
          %262 = dma.hbm_to_vmem [thread:$0]  %s2, 512, %s257, [#allocation6], 128, 128, 8
        $region16: #{tpu_custom_call.1} parent=11 // pred_fallthru
          _
        // Predicated region
        $region17: #{tpu_custom_call.1} parent=11 // pred_check
          %p263 = pneg %p115
        $region18: #{tpu_custom_call.1} parent=11 // pred_check_branch
          %265 = sbr.rel (%p263) target = $region20
        $region19: #{tpu_custom_call.1} parent=11 // pred_region
          _
        $region20: #{tpu_custom_call.1} parent=11 // pred_fallthru
          _
        // Predicated region
        $region21: #{tpu_custom_call.1} parent=11 // pred_check
          %p266 = pneg %p136
        $region22: #{tpu_custom_call.1} parent=11 // pred_check_branch
          %268 = sbr.rel (%p266) target = $region24
        $region23: #{tpu_custom_call.1} parent=11 // pred_region
          %s270 = ssub.s32 512, 512
          %271 = vsyncadd [#allocation6], %s270
          %s272 = sshll.u32 [#allocation7], 4
          %s273 = int_to_ptr.vmem [resolvable:$true] %s272
          %278 = dma.hbm_to_vmem [thread:$0]  %s4, 512, %s273, [#allocation6], 128, 128, 8
        $region24: #{tpu_custom_call.1} parent=11 // pred_fallthru
          _
        // Predicated region
        $region25: #{tpu_custom_call.1} parent=11 // pred_check
          %p279 = pneg %p157
        $region26: #{tpu_custom_call.1} parent=11 // pred_check_branch
          %281 = sbr.rel (%p279) target = $region28
        $region27: #{tpu_custom_call.1} parent=11 // pred_region
          _
        $region28: #{tpu_custom_call.1} parent=11 // pred_fallthru
          _
      $region12: #{tpu_custom_call.1} parent=5 // pred_fallthru
        _
      %p282 = scmp.lt.s32.totalorder %s21, 2
      // Predicated region
      $region29: #{tpu_custom_call.1} parent=5 // pred_check
        %p283 = pneg %p282
      $region30: #{tpu_custom_call.1} parent=5 // pred_check_branch
        %285 = sbr.rel (%p283) target = $region32
      $region31: #{tpu_custom_call.1} parent=5 // pred_region
        // Predicated region
        $region33: #{tpu_custom_call.1} parent=31 // pred_check
          %p286 = pneg %p41
        $region34: #{tpu_custom_call.1} parent=31 // pred_check_branch
          %288 = sbr.rel (%p286) target = $region36
        $region35: #{tpu_custom_call.1} parent=31 // pred_region
          %p289 = scmp.lt.s32.totalorder %s21, 1
          %s290 = scalar_select %p289, %s21, 1
          %s291 = smul.addr %s290, 2
          %s292 = smul.addr %s291, 8
          %s293 = scalar_lea.vmem %s0, %s292
        $region36: #{tpu_custom_call.1} parent=31 // pred_fallthru
          _
        // Predicated region
        $region37: #{tpu_custom_call.1} parent=31 // pred_check
          %p294 = pneg %p67
        $region38: #{tpu_custom_call.1} parent=31 // pred_check_branch
          %296 = sbr.rel (%p294) target = $region40
        $region39: #{tpu_custom_call.1} parent=31 // pred_region
          %s297 = sand.u32 %s57, 1
          %s298 = scalar_lea.sflag [#allocation3], %s297
          %s299 = sand.u32 %s57, 1
          %s300 = smul.addr %s299, 16
          %s301 = scalar_lea.vmem [#allocation2], %s300
          %s303 = ssub.s32 256, 256
          %304 = vsyncadd %s298, %s303
          %s305 = smul.addr %s21, 2
          %s306 = smul.addr %s305, 128
          %s307 = scalar_lea.hbm %s1, %s306
          %s308 = sshll.u32 %s301, 4
          %s309 = int_to_ptr.vmem [resolvable:$true] %s308
          %314 = dma.hbm_to_vmem [thread:$0]  %s307, 256, %s309, %s298, 128, 128, 8
        $region40: #{tpu_custom_call.1} parent=31 // pred_fallthru
          _
        // Predicated region
        $region41: #{tpu_custom_call.1} parent=31 // pred_check
          %p315 = pneg %p177
        $region42: #{tpu_custom_call.1} parent=31 // pred_check_branch
          %317 = sbr.rel (%p315) target = $region44
        $region43: #{tpu_custom_call.1} parent=31 // pred_region
          %p318 = scmp.lt.s32.totalorder %s21, 1
          %s319 = scalar_select %p318, %s21, 1
          %s320 = scalar_lea.vmem %s6, %s319
        $region44: #{tpu_custom_call.1} parent=31 // pred_fallthru
          _
        // Predicated region
        $region45: #{tpu_custom_call.1} parent=31 // pred_check
          %p321 = pneg %p203
        $region46: #{tpu_custom_call.1} parent=31 // pred_check_branch
          %323 = sbr.rel (%p321) target = $region48
        $region47: #{tpu_custom_call.1} parent=31 // pred_region
          %p324 = scmp.lt.s32.totalorder %s21, 1
          %s325 = scalar_select %p324, %s21, 1
          %s326 = smul.addr %s325, 2
          %s327 = smul.addr %s326, 8
          %s328 = scalar_lea.vmem %s7, %s327
        $region48: #{tpu_custom_call.1} parent=31 // pred_fallthru
          _
      $region32: #{tpu_custom_call.1} parent=5 // pred_fallthru
        _
      %p329 = scmp.le.s32.totalorder 1, %s21
      %p330 = scmp.lt.s32.totalorder %s21, 3
      %p331 = pnand %p329, %p330
      %p332 = pneg %p331
      // Predicated region
      $region49: #{tpu_custom_call.1} parent=5 // pred_check
        _
      $region50: #{tpu_custom_call.1} parent=5 // pred_check_branch
        %334 = sbr.rel (%p331) target = $region52
      $region51: #{tpu_custom_call.1} parent=5 // pred_region
        %s335 = ssub.s32 %s21, 1
        %s336 = sand.u32 %s60, 1
        %s337 = scalar_lea.sflag [#allocation3], %s336
        %s338 = sand.u32 %s60, 1
        %s339 = smul.addr %s338, 16
        %s340 = scalar_lea.vmem [#allocation2], %s339
        // Predicated region
        $region53: #{tpu_custom_call.1} parent=51 // pred_check
          %p341 = pneg %p73
        $region54: #{tpu_custom_call.1} parent=51 // pred_check_branch
          %343 = sbr.rel (%p341) target = $region56
        $region55: #{tpu_custom_call.1} parent=51 // pred_region
          %344 = dma.done %s337, 256
        $region56: #{tpu_custom_call.1} parent=51 // pred_fallthru
          _
        // Predicated region
        $region57: #{tpu_custom_call.1} parent=51 // pred_check
          %p345 = pneg %p94
        $region58: #{tpu_custom_call.1} parent=51 // pred_check_branch
          %347 = sbr.rel (%p345) target = $region60
        $region59: #{tpu_custom_call.1} parent=51 // pred_region
          %348 = dma.done [#allocation6], 512
        $region60: #{tpu_custom_call.1} parent=51 // pred_fallthru
          _
        // Predicated region
        $region61: #{tpu_custom_call.1} parent=51 // pred_check
          %p349 = pneg %p136
        $region62: #{tpu_custom_call.1} parent=51 // pred_check_branch
          %351 = sbr.rel (%p349) target = $region64
        $region63: #{tpu_custom_call.1} parent=51 // pred_region
          %352 = dma.done [#allocation6], 512
        $region64: #{tpu_custom_call.1} parent=51 // pred_fallthru
          _
        %p353 = scmp.lt.s32.totalorder %s26, 1
        %s354 = scalar_select %p353, %s26, 1
        %s355 = smul.addr %s354, 2
        %s356 = smul.addr %s355, 8
        %s357 = scalar_lea.vmem %s0, %s356
        %p358 = pneg %p47
        %p359 = pneg %p44
        %s360 = sand.u32 %s60, 1
        %s361 = scalar_lea.sflag [#allocation3], %s360
        %s362 = sand.u32 %s60, 1
        %s363 = smul.addr %s362, 16
        %s364 = scalar_lea.vmem [#allocation2], %s363
        %p365 = pneg %p73
        %p366 = pneg %p70
        %p367 = pneg %p94
        %p368 = pneg %p91
        %p369 = pneg %p115
        %p370 = pneg %p112
        %p371 = pneg %p136
        %p372 = pneg %p133
        %p373 = pneg %p157
        %p374 = pneg %p154
        %p375 = scmp.lt.s32.totalorder %s26, 1
        %s376 = scalar_select %p375, %s26, 1
        %s377 = scalar_lea.vmem %s6, %s376
        %p378 = pneg %p183
        %p379 = pneg %p180
        %p380 = scmp.lt.s32.totalorder %s26, 1
        %s381 = scalar_select %p380, %s26, 1
        %s382 = smul.addr %s381, 2
        %s383 = smul.addr %s382, 8
        %s384 = scalar_lea.vmem %s7, %s383
        %p385 = pneg %p209
        %p386 = pneg %p206
        %p387 = pneg %p235
        %p388 = pneg %p232
        %s389 = sand.u32 %s222, 1
        %s390 = scalar_lea.sflag [#allocation4], %s389
        %s391 = sand.u32 %s222, 1
        %s392 = smul.addr %s391, 16
        %s393 = scalar_lea.vmem [#allocation8], %s392
        %p394 = scmp.lt.s32.totalorder %s26, 1
        %s395 = scalar_select %p394, %s26, 1
        %s396 = smul.addr %s395, 2
        %s397 = smul.addr %s396, 8
        %s398 = scalar_lea.vmem %s0, %s397
        %p399 = scmp.lt.s32.totalorder %s26, 1
        %s400 = scalar_select %p399, %s26, 1
        %s401 = scalar_lea.vmem %s6, %s400
        %p402 = scmp.lt.s32.totalorder %s26, 1
        %s403 = scalar_select %p402, %s26, 1
        %s404 = smul.addr %s403, 2
        %s405 = smul.addr %s404, 8
        %s406 = scalar_lea.vmem %s7, %s405
        %v407 = vld [vmem:[%s398] sm:$0xff]
        %v408 = vld [vmem:[%s398 + $0x8] sm:$0xff]
        %v409 = vld [vmem:[%s340] sm:$0xff]
        %v410 = vld [vmem:[%s340 + $0x8] sm:$0xff]
        %v411 = vld [vmem:[#allocation5] sm:$0xff]
        %v412 = vld [vmem:[#allocation5 + $0x8] sm:$0xff]
        %v413 = vld [vmem:[#allocation5 + $0x10] sm:$0xff]
        %v414 = vld [vmem:[#allocation5 + $0x18] sm:$0xff]
        %v415 = vld [vmem:[#allocation7] sm:$0xff]
        %v416 = vld [vmem:[#allocation7 + $0x8] sm:$0xff]
        %v417 = vld [vmem:[#allocation7 + $0x10] sm:$0xff]
        %v418 = vld [vmem:[#allocation7 + $0x18] sm:$0xff]
        %v419 = vld [vmem:[%s3] sm:$0x1]
        %v420 = vld [vmem:[%s5] sm:$0x1]
        %v422 = vlaneseq
        %v423 = vshrl.u32 %v422, 7
        %v424 = vsub.s32 0, %v423
        %v425 = vrot.slane %v419, %v424
        %vm427 = vcmask 261120
        %v429 = vsel %vm427, %v407, 0
        %v432 = vsel %vm427, %v408, 0
        %434 = vmatprep.subr.mxu0 0.0
        %435 = vmatpush1.msra.mxu0 %v411
        %436 = vmatprep.subr.mxu0 0.0
        %437 = vmatpush1.msra.mxu0 %v412
        %438 = vmatprep.subr.mxu0 0.0
        %439 = vmatpush1.msra.mxu0 %v413
        %440 = vmatprep.subr.mxu0 0.0
        %441 = vmatpush1.msra.mxu0 %v414
        %442 = vmatprep.subr.mxu0 0.0
        %443 = vmatpush1.msra.mxu0 0.0
        %444 = vmatprep.subr.mxu0 0.0
        %445 = vmatpush1.msra.mxu0 0.0
        %446 = vmatprep.subr.mxu0 0.0
        %447 = vmatpush1.msra.mxu0 0.0
        %448 = vmatprep.subr.mxu0 0.0
        %449 = vmatpush1.msra.mxu0 0.0
        %450 = vmatprep.subr.mxu0 0.0
        %451 = vmatpush1.msra.mxu0 0.0
        %452 = vmatprep.subr.mxu0 0.0
        %453 = vmatpush1.msra.mxu0 0.0
        %454 = vmatprep.subr.mxu0 0.0
        %455 = vmatpush1.msra.mxu0 0.0
        %456 = vmatprep.subr.mxu0 0.0
        %457 = vmatpush1.msra.mxu0 0.0
        %458 = vmatprep.subr.mxu0 0.0
        %459 = vmatpush1.msra.mxu0 0.0
        %460 = vmatprep.subr.mxu0 0.0
        %461 = vmatpush1.msra.mxu0 0.0
        %462 = vmatprep.subr.mxu0 0.0
        %463 = vmatpush1.msra.mxu0 0.0
        %464 = vmatprep.subr.mxu0 0.0
        %465 = vmatpush1.msra.mxu0 0.0
        %466 = vmatprep.subr.mxu0 0.0
        %467 = vmatpush1.msra.mxu0 0.0
        %468 = vmatprep.subr.mxu0 0.0
        %469 = vmatpush1.msra.mxu0 0.0
        %470 = vmatprep.subr.mxu0 0.0
        %471 = vmatpush1.msra.mxu0 0.0
        %472 = vmatprep.subr.mxu0 0.0
        %473 = vmatpush1.msra.mxu0 0.0
        %474 = vmatprep.subr.mxu0 0.0
        %475 = vmatpush1.msra.mxu0 0.0
        %476 = vmatprep.subr.mxu0 0.0
        %477 = vmatpush1.msra.mxu0 0.0
        %478 = vmatprep.subr.mxu0 0.0
        %479 = vmatpush1.msra.mxu0 0.0
        %480 = vmatprep.subr.mxu0 0.0
        %481 = vmatpush1.msra.mxu0 0.0
        %482 = vmatprep.subr.mxu0 0.0
        %483 = vmatpush1.msra.mxu0 0.0
        %484 = vmatprep.subr.mxu0 0.0
        %485 = vmatpush1.msra.mxu0 0.0
        %486 = vmatprep.subr.mxu0 0.0
        %487 = vmatpush1.msra.mxu0 0.0
        %488 = vmatprep.subr.mxu0 0.0
        %489 = vmatpush1.msra.mxu0 0.0
        %490 = vmatprep.subr.mxu0 0.0
        %491 = vmatpush1.msra.mxu0 0.0
        %492 = vmatprep.subr.mxu0 0.0
        %493 = vmatpush1.msra.mxu0 0.0
        %494 = vmatprep.subr.mxu0 0.0
        %495 = vmatpush1.msra.mxu0 0.0
        %496 = vmatprep.subr.mxu0 0.0
        %497 = vmatpush1.msra.mxu0 0.0
        %498 = vmatprep.mubr.f32.mxu0 0.0
        %499 = vmatmul.mubr.f32.gmra.mrb[0].mxu0 %v429
        %v500 = vpop.f32.mrb[0].mxu0
        %v501 = vadd.f32 %v425, %v500
        %v502 = vpop.f32.mrb[0].mxu0
        %503 = vmatprep.mubr.f32.mxu0 0.0
        %504 = vmatmul.mubr.f32.gmra.mrb[0].mxu0 %v432
        %v505 = vpop.f32.mrb[0].mxu0
        %v506 = vadd.f32 %v425, %v505
        %v507 = vpop.f32.mrb[0].mxu0
        %508 = vdwg.mxu0
        %v510 = vlaneseq
        %v511 = vshrl.u32 %v510, 7
        %v512 = vsub.s32 0, %v511
        %v513 = vrot.slane %v420, %v512
        %v516 = vsel %vm427, %v409, 0
        %v519 = vsel %vm427, %v410, 0
        %521 = vmatprep.subr.mxu0 0.0
        %522 = vmatpush1.msra.mxu0 %v415
        %523 = vmatprep.subr.mxu0 0.0
        %524 = vmatpush1.msra.mxu0 %v416
        %525 = vmatprep.subr.mxu0 0.0
        %526 = vmatpush1.msra.mxu0 %v417
        %527 = vmatprep.subr.mxu0 0.0
        %528 = vmatpush1.msra.mxu0 %v418
        %529 = vmatprep.subr.mxu0 0.0
        %530 = vmatpush1.msra.mxu0 0.0
        %531 = vmatprep.subr.mxu0 0.0
        %532 = vmatpush1.msra.mxu0 0.0
        %533 = vmatprep.subr.mxu0 0.0
        %534 = vmatpush1.msra.mxu0 0.0
        %535 = vmatprep.subr.mxu0 0.0
        %536 = vmatpush1.msra.mxu0 0.0
        %537 = vmatprep.subr.mxu0 0.0
        %538 = vmatpush1.msra.mxu0 0.0
        %539 = vmatprep.subr.mxu0 0.0
        %540 = vmatpush1.msra.mxu0 0.0
        %541 = vmatprep.subr.mxu0 0.0
        %542 = vmatpush1.msra.mxu0 0.0
        %543 = vmatprep.subr.mxu0 0.0
        %544 = vmatpush1.msra.mxu0 0.0
        %545 = vmatprep.subr.mxu0 0.0
        %546 = vmatpush1.msra.mxu0 0.0
        %547 = vmatprep.subr.mxu0 0.0
        %548 = vmatpush1.msra.mxu0 0.0
        %549 = vmatprep.subr.mxu0 0.0
        %550 = vmatpush1.msra.mxu0 0.0
        %551 = vmatprep.subr.mxu0 0.0
        %552 = vmatpush1.msra.mxu0 0.0
        %553 = vmatprep.subr.mxu0 0.0
        %554 = vmatpush1.msra.mxu0 0.0
        %555 = vmatprep.subr.mxu0 0.0
        %556 = vmatpush1.msra.mxu0 0.0
        %557 = vmatprep.subr.mxu0 0.0
        %558 = vmatpush1.msra.mxu0 0.0
        %559 = vmatprep.subr.mxu0 0.0
        %560 = vmatpush1.msra.mxu0 0.0
        %561 = vmatprep.subr.mxu0 0.0
        %562 = vmatpush1.msra.mxu0 0.0
        %563 = vmatprep.subr.mxu0 0.0
        %564 = vmatpush1.msra.mxu0 0.0
        %565 = vmatprep.subr.mxu0 0.0
        %566 = vmatpush1.msra.mxu0 0.0
        %567 = vmatprep.subr.mxu0 0.0
        %568 = vmatpush1.msra.mxu0 0.0
        %569 = vmatprep.subr.mxu0 0.0
        %570 = vmatpush1.msra.mxu0 0.0
        %571 = vmatprep.subr.mxu0 0.0
        %572 = vmatpush1.msra.mxu0 0.0
        %573 = vmatprep.subr.mxu0 0.0
        %574 = vmatpush1.msra.mxu0 0.0
        %575 = vmatprep.subr.mxu0 0.0
        %576 = vmatpush1.msra.mxu0 0.0
        %577 = vmatprep.subr.mxu0 0.0
        %578 = vmatpush1.msra.mxu0 0.0
        %579 = vmatprep.subr.mxu0 0.0
        %580 = vmatpush1.msra.mxu0 0.0
        %581 = vmatprep.subr.mxu0 0.0
        %582 = vmatpush1.msra.mxu0 0.0
        %583 = vmatprep.subr.mxu0 0.0
        %584 = vmatpush1.msra.mxu0 0.0
        %585 = vmatprep.mubr.f32.mxu0 0.0
        %586 = vmatmul.mubr.f32.gmra.mrb[0].mxu0 %v516
        %v587 = vpop.f32.mrb[0].mxu0
        %v588 = vadd.f32 %v513, %v587
        %v589 = vpop.f32.mrb[0].mxu0
        %590 = vmatprep.mubr.f32.mxu0 0.0
        %591 = vmatmul.mubr.f32.gmra.mrb[0].mxu0 %v519
        %v592 = vpop.f32.mrb[0].mxu0
        %v593 = vadd.f32 %v513, %v592
        %v594 = vpop.f32.mrb[0].mxu0
        %595 = vdwg.mxu0
        %v596 = vld [vmem:[%s401] sm:$0x1]
        %v597 = vld [vmem:[%s406] sm:$0xff]
        %v598 = vld [vmem:[%s406 + $0x8] sm:$0xff]
        %vm599 = vcmask 64512
        %v601 = vsel %vm599, %v501, 0
        %v604 = vsel %vm599, %v506, 0
        %v607 = vsel %vm599, %v588, 0
        %v610 = vsel %vm599, %v593, 0
        %612 = vmatprep.subr.mxu0 0.0
        %613 = vmatpush1.xpose.msra.mxu0 %v607
        %614 = vmatprep.subr.mxu0 0.0
        %615 = vmatpush1.xpose.msra.mxu0 %v610
        %616 = vmatprep.subr.mxu0 0.0
        %617 = vmatpush1.xpose.msra.mxu0 0.0
        %618 = vmatprep.subr.mxu0 0.0
        %619 = vmatpush1.xpose.msra.mxu0 0.0
        %620 = vmatprep.subr.mxu0 0.0
        %621 = vmatpush1.xpose.msra.mxu0 0.0
        %622 = vmatprep.subr.mxu0 0.0
        %623 = vmatpush1.xpose.msra.mxu0 0.0
        %624 = vmatprep.subr.mxu0 0.0
        %625 = vmatpush1.xpose.msra.mxu0 0.0
        %626 = vmatprep.subr.mxu0 0.0
        %627 = vmatpush1.xpose.msra.mxu0 0.0
        %628 = vmatprep.subr.mxu0 0.0
        %629 = vmatpush1.xpose.msra.mxu0 0.0
        %630 = vmatprep.subr.mxu0 0.0
        %631 = vmatpush1.xpose.msra.mxu0 0.0
        %632 = vmatprep.subr.mxu0 0.0
        %633 = vmatpush1.xpose.msra.mxu0 0.0
        %634 = vmatprep.subr.mxu0 0.0
        %635 = vmatpush1.xpose.msra.mxu0 0.0
        %636 = vmatprep.subr.mxu0 0.0
        %637 = vmatpush1.xpose.msra.mxu0 0.0
        %638 = vmatprep.subr.mxu0 0.0
        %639 = vmatpush1.xpose.msra.mxu0 0.0
        %640 = vmatprep.subr.mxu0 0.0
        %641 = vmatpush1.xpose.msra.mxu0 0.0
        %642 = vmatprep.subr.mxu0 0.0
        %643 = vmatpush1.xpose.msra.mxu0 0.0
        %644 = vmatprep.subr.mxu0 0.0
        %645 = vmatpush1.xpose.msra.mxu0 0.0
        %646 = vmatprep.subr.mxu0 0.0
        %647 = vmatpush1.xpose.msra.mxu0 0.0
        %648 = vmatprep.subr.mxu0 0.0
        %649 = vmatpush1.xpose.msra.mxu0 0.0
        %650 = vmatprep.subr.mxu0 0.0
        %651 = vmatpush1.xpose.msra.mxu0 0.0
        %652 = vmatprep.subr.mxu0 0.0
        %653 = vmatpush1.xpose.msra.mxu0 0.0
        %654 = vmatprep.subr.mxu0 0.0
        %655 = vmatpush1.xpose.msra.mxu0 0.0
        %656 = vmatprep.subr.mxu0 0.0
        %657 = vmatpush1.xpose.msra.mxu0 0.0
        %658 = vmatprep.subr.mxu0 0.0
        %659 = vmatpush1.xpose.msra.mxu0 0.0
        %660 = vmatprep.subr.mxu0 0.0
        %661 = vmatpush1.xpose.msra.mxu0 0.0
        %662 = vmatprep.subr.mxu0 0.0
        %663 = vmatpush1.xpose.msra.mxu0 0.0
        %664 = vmatprep.subr.mxu0 0.0
        %665 = vmatpush1.xpose.msra.mxu0 0.0
        %666 = vmatprep.subr.mxu0 0.0
        %667 = vmatpush1.xpose.msra.mxu0 0.0
        %668 = vmatprep.subr.mxu0 0.0
        %669 = vmatpush1.xpose.msra.mxu0 0.0
        %670 = vmatprep.subr.mxu0 0.0
        %671 = vmatpush1.xpose.msra.mxu0 0.0
        %672 = vmatprep.subr.mxu0 0.0
        %673 = vmatpush1.xpose.msra.mxu0 0.0
        %674 = vmatprep.subr.mxu0 0.0
        %675 = vmatpush1.xpose.msra.mxu0 0.0
        %676 = vmatprep.mubr.f32.mxu0 0.0
        %677 = vmatmul.mubr.f32.gmra.mrb[0].mxu0 %v601
        %v678 = vpop.f32.mrb[0].mxu0
        %v679 = vadd.f32 0.0, %v678
        %v680 = vpop.f32.mrb[0].mxu0
        %681 = vmatprep.mubr.f32.mxu0 0.0
        %682 = vmatmul.mubr.f32.gmra.mrb[0].mxu0 %v604
        %v683 = vpop.f32.mrb[0].mxu0
        %v684 = vadd.f32 0.0, %v683
        %v685 = vpop.f32.mrb[0].mxu0
        %686 = vdwg.mxu0
        %v687 = vmul.f32 %v679, 0.35355338
        %v688 = vmul.f32 %v684, 0.35355338
        %vm689 = vcmask 130048
        %v690 = vsel %vm689, %v687, -inf
        %691 = vmax.xlane.f32.xlu0 %v690
        %v692 = vpop.xlane.xlu0 %691
        %v693 = vsel %vm689, %v688, -inf
        %694 = vmax.xlane.f32.xlu0 %v693
        %v695 = vpop.xlane.xlu0 %694
        %v696 = vsub.f32 %v687, %v692
        %v697 = vsub.f32 %v688, %v695
        %v698 = vmul.f32 %v696, 1.442695
        %v699 = vpow.pop %v698
        %v700 = vmul.f32 %v697, 1.442695
        %v701 = vpow.pop %v700
        %v702 = vsel %vm689, %v699, 0.0
        %703 = vadd.xlane.f32.xlu0 %v702
        %v704 = vpop.xlane.xlu0 %703
        %v705 = vsel %vm689, %v701, 0.0
        %706 = vadd.xlane.f32.xlu0 %v705
        %v707 = vpop.xlane.xlu0 %706
        %v708 = vrcp.pop %v704
        %v709 = vmul.f32 1.0, %v708
        %v710 = vrcp.pop %v707
        %v711 = vmul.f32 1.0, %v710
        %v713 = vlaneseq
        %v714 = vshrl.u32 %v713, 7
        %v715 = vsub.s32 0, %v714
        %v716 = vrot.slane %v596, %v715
        %v718 = vmul.f32 %v699, %v716
        %v719 = vmul.f32 %v701, %v716
        %v720 = vsel %vm689, %v718, 0.0
        %721 = vadd.xlane.f32.xlu0 %v720
        %v722 = vpop.xlane.xlu0 %721
        %v723 = vsel %vm689, %v719, 0.0
        %724 = vadd.xlane.f32.xlu0 %v723
        %v725 = vpop.xlane.xlu0 %724
        %v726 = vmul.f32 %v709, %v722
        %v727 = vmul.f32 %v711, %v725
        %v728 = vmul.f32 %v597, %v709
        %v729 = vmul.f32 %v598, %v711
        %731 = vset.pattern.permute.xlu0 0
        %732 = vperm.xlu0 %731, %v728
        %v733 = vpop.permute.xlu0 %732
        %736 = vset.pattern.permute.xlu0 0
        %737 = vperm.xlu0 %736, %v729
        %v738 = vpop.permute.xlu0 %737
        %v740 = vmul.f32 %v699, %v733
        %v741 = vmul.f32 %v701, %v738
        %v742 = vsel %vm689, %v740, 0.0
        %v743 = vsel %vm689, %v741, 0.0
        %v744 = vadd.f32 %v742, %v743
        %v745 = vrot.slane %v744, 4
        %v746 = vadd.f32 %v744, %v745
        %v747 = vrot.slane %v746, 2
        %v748 = vadd.f32 %v746, %v747
        %v749 = vrot.slane %v748, 1
        %v750 = vadd.f32 %v748, %v749
        %v751 = vmul.f32 %v726, %v750
        %v752 = vmul.f32 %v727, %v750
        %v753 = vadd.f32 %v751, 0.0
        %v754 = vadd.f32 %v752, 0.0
        %755 = vrot.lane.b32.xlu0 %v501, 120
        %v756 = vpop.permute.xlu0 %755
        %757 = vrot.lane.b32.xlu0 %v506, 120
        %v758 = vpop.permute.xlu0 %757
        %759 = vrot.lane.b32.xlu0 %v588, 120
        %v760 = vpop.permute.xlu0 %759
        %761 = vrot.lane.b32.xlu0 %v593, 120
        %v762 = vpop.permute.xlu0 %761
        %v763 = vsel %vm599, %v756, 0
        %v765 = vsel %vm599, %v758, 0
        %v767 = vsel %vm599, %v760, 0
        %v769 = vsel %vm599, %v762, 0
        %771 = vmatprep.subr.mxu0 0.0
        %772 = vmatpush1.xpose.msra.mxu0 %v767
        %773 = vmatprep.subr.mxu0 0.0
        %774 = vmatpush1.xpose.msra.mxu0 %v769
        %775 = vmatprep.subr.mxu0 0.0
        %776 = vmatpush1.xpose.msra.mxu0 0.0
        %777 = vmatprep.subr.mxu0 0.0
        %778 = vmatpush1.xpose.msra.mxu0 0.0
        %779 = vmatprep.subr.mxu0 0.0
        %780 = vmatpush1.xpose.msra.mxu0 0.0
        %781 = vmatprep.subr.mxu0 0.0
        %782 = vmatpush1.xpose.msra.mxu0 0.0
        %783 = vmatprep.subr.mxu0 0.0
        %784 = vmatpush1.xpose.msra.mxu0 0.0
        %785 = vmatprep.subr.mxu0 0.0
        %786 = vmatpush1.xpose.msra.mxu0 0.0
        %787 = vmatprep.subr.mxu0 0.0
        %788 = vmatpush1.xpose.msra.mxu0 0.0
        %789 = vmatprep.subr.mxu0 0.0
        %790 = vmatpush1.xpose.msra.mxu0 0.0
        %791 = vmatprep.subr.mxu0 0.0
        %792 = vmatpush1.xpose.msra.mxu0 0.0
        %793 = vmatprep.subr.mxu0 0.0
        %794 = vmatpush1.xpose.msra.mxu0 0.0
        %795 = vmatprep.subr.mxu0 0.0
        %796 = vmatpush1.xpose.msra.mxu0 0.0
        %797 = vmatprep.subr.mxu0 0.0
        %798 = vmatpush1.xpose.msra.mxu0 0.0
        %799 = vmatprep.subr.mxu0 0.0
        %800 = vmatpush1.xpose.msra.mxu0 0.0
        %801 = vmatprep.subr.mxu0 0.0
        %802 = vmatpush1.xpose.msra.mxu0 0.0
        %803 = vmatprep.subr.mxu0 0.0
        %804 = vmatpush1.xpose.msra.mxu0 0.0
        %805 = vmatprep.subr.mxu0 0.0
        %806 = vmatpush1.xpose.msra.mxu0 0.0
        %807 = vmatprep.subr.mxu0 0.0
        %808 = vmatpush1.xpose.msra.mxu0 0.0
        %809 = vmatprep.subr.mxu0 0.0
        %810 = vmatpush1.xpose.msra.mxu0 0.0
        %811 = vmatprep.subr.mxu0 0.0
        %812 = vmatpush1.xpose.msra.mxu0 0.0
        %813 = vmatprep.subr.mxu0 0.0
        %814 = vmatpush1.xpose.msra.mxu0 0.0
        %815 = vmatprep.subr.mxu0 0.0
        %816 = vmatpush1.xpose.msra.mxu0 0.0
        %817 = vmatprep.subr.mxu0 0.0
        %818 = vmatpush1.xpose.msra.mxu0 0.0
        %819 = vmatprep.subr.mxu0 0.0
        %820 = vmatpush1.xpose.msra.mxu0 0.0
        %821 = vmatprep.subr.mxu0 0.0
        %822 = vmatpush1.xpose.msra.mxu0 0.0
        %823 = vmatprep.subr.mxu0 0.0
        %824 = vmatpush1.xpose.msra.mxu0 0.0
        %825 = vmatprep.subr.mxu0 0.0
        %826 = vmatpush1.xpose.msra.mxu0 0.0
        %827 = vmatprep.subr.mxu0 0.0
        %828 = vmatpush1.xpose.msra.mxu0 0.0
        %829 = vmatprep.subr.mxu0 0.0
        %830 = vmatpush1.xpose.msra.mxu0 0.0
        %831 = vmatprep.subr.mxu0 0.0
        %832 = vmatpush1.xpose.msra.mxu0 0.0
        %833 = vmatprep.subr.mxu0 0.0
        %834 = vmatpush1.xpose.msra.mxu0 0.0
        %835 = vmatprep.mubr.f32.mxu0 0.0
        %836 = vmatmul.mubr.f32.gmra.mrb[0].mxu0 %v763
        %v837 = vpop.f32.mrb[0].mxu0
        %v838 = vadd.f32 0.0, %v837
        %v839 = vpop.f32.mrb[0].mxu0
        %840 = vmatprep.mubr.f32.mxu0 0.0
        %841 = vmatmul.mubr.f32.gmra.mrb[0].mxu0 %v765
        %v842 = vpop.f32.mrb[0].mxu0
        %v843 = vadd.f32 0.0, %v842
        %v844 = vpop.f32.mrb[0].mxu0
        %845 = vdwg.mxu0
        %v846 = vmul.f32 %v838, 0.35355338
        %v847 = vmul.f32 %v843, 0.35355338
        %v848 = vsel %vm689, %v846, -inf
        %849 = vmax.xlane.f32.xlu0 %v848
        %v850 = vpop.xlane.xlu0 %849
        %v851 = vsel %vm689, %v847, -inf
        %852 = vmax.xlane.f32.xlu0 %v851
        %v853 = vpop.xlane.xlu0 %852
        %v854 = vsub.f32 %v846, %v850
        %v855 = vsub.f32 %v847, %v853
        %v856 = vmul.f32 %v854, 1.442695
        %v857 = vpow.pop %v856
        %v858 = vmul.f32 %v855, 1.442695
        %v859 = vpow.pop %v858
        %v860 = vsel %vm689, %v857, 0.0
        %861 = vadd.xlane.f32.xlu0 %v860
        %v862 = vpop.xlane.xlu0 %861
        %v863 = vsel %vm689, %v859, 0.0
        %864 = vadd.xlane.f32.xlu0 %v863
        %v865 = vpop.xlane.xlu0 %864
        %v866 = vrcp.pop %v862
        %v867 = vmul.f32 1.0, %v866
        %v868 = vrcp.pop %v865
        %v869 = vmul.f32 1.0, %v868
        %v870 = vmul.f32 %v857, %v716
        %v871 = vmul.f32 %v859, %v716
        %v872 = vsel %vm689, %v870, 0.0
        %873 = vadd.xlane.f32.xlu0 %v872
        %v874 = vpop.xlane.xlu0 %873
        %v875 = vsel %vm689, %v871, 0.0
        %876 = vadd.xlane.f32.xlu0 %v875
        %v877 = vpop.xlane.xlu0 %876
        %v878 = vmul.f32 %v867, %v874
        %v879 = vmul.f32 %v869, %v877
        %v880 = vmul.f32 %v597, %v867
        %v881 = vmul.f32 %v598, %v869
        %883 = vset.pattern.permute.xlu0 0
        %884 = vperm.xlu0 %883, %v880
        %v885 = vpop.permute.xlu0 %884
        %888 = vset.pattern.permute.xlu0 0
        %889 = vperm.xlu0 %888, %v881
        %v890 = vpop.permute.xlu0 %889
        %v892 = vmul.f32 %v857, %v885
        %v893 = vmul.f32 %v859, %v890
        %v894 = vsel %vm689, %v892, 0.0
        %v895 = vsel %vm689, %v893, 0.0
        %v896 = vadd.f32 %v894, %v895
        %v897 = vrot.slane %v896, 4
        %v898 = vadd.f32 %v896, %v897
        %v899 = vrot.slane %v898, 2
        %v900 = vadd.f32 %v898, %v899
        %v901 = vrot.slane %v900, 1
        %v902 = vadd.f32 %v900, %v901
        %v903 = vmul.f32 %v878, %v902
        %v904 = vmul.f32 %v879, %v902
        %v905 = vadd.f32 %v753, %v903
        %v906 = vadd.f32 %v754, %v904
        %907 = vrot.lane.b32.xlu0 %v501, 112
        %v908 = vpop.permute.xlu0 %907
        %909 = vrot.lane.b32.xlu0 %v506, 112
        %v910 = vpop.permute.xlu0 %909
        %911 = vrot.lane.b32.xlu0 %v588, 112
        %v912 = vpop.permute.xlu0 %911
        %913 = vrot.lane.b32.xlu0 %v593, 112
        %v914 = vpop.permute.xlu0 %913
        %v915 = vsel %vm599, %v908, 0
        %v917 = vsel %vm599, %v910, 0
        %v919 = vsel %vm599, %v912, 0
        %v921 = vsel %vm599, %v914, 0
        %923 = vmatprep.subr.mxu0 0.0
        %924 = vmatpush1.xpose.msra.mxu0 %v919
        %925 = vmatprep.subr.mxu0 0.0
        %926 = vmatpush1.xpose.msra.mxu0 %v921
        %927 = vmatprep.subr.mxu0 0.0
        %928 = vmatpush1.xpose.msra.mxu0 0.0
        %929 = vmatprep.subr.mxu0 0.0
        %930 = vmatpush1.xpose.msra.mxu0 0.0
        %931 = vmatprep.subr.mxu0 0.0
        %932 = vmatpush1.xpose.msra.mxu0 0.0
        %933 = vmatprep.subr.mxu0 0.0
        %934 = vmatpush1.xpose.msra.mxu0 0.0
        %935 = vmatprep.subr.mxu0 0.0
        %936 = vmatpush1.xpose.msra.mxu0 0.0
        %937 = vmatprep.subr.mxu0 0.0
        %938 = vmatpush1.xpose.msra.mxu0 0.0
        %939 = vmatprep.subr.mxu0 0.0
        %940 = vmatpush1.xpose.msra.mxu0 0.0
        %941 = vmatprep.subr.mxu0 0.0
        %942 = vmatpush1.xpose.msra.mxu0 0.0
        %943 = vmatprep.subr.mxu0 0.0
        %944 = vmatpush1.xpose.msra.mxu0 0.0
        %945 = vmatprep.subr.mxu0 0.0
        %946 = vmatpush1.xpose.msra.mxu0 0.0
        %947 = vmatprep.subr.mxu0 0.0
        %948 = vmatpush1.xpose.msra.mxu0 0.0
        %949 = vmatprep.subr.mxu0 0.0
        %950 = vmatpush1.xpose.msra.mxu0 0.0
        %951 = vmatprep.subr.mxu0 0.0
        %952 = vmatpush1.xpose.msra.mxu0 0.0
        %953 = vmatprep.subr.mxu0 0.0
        %954 = vmatpush1.xpose.msra.mxu0 0.0
        %955 = vmatprep.subr.mxu0 0.0
        %956 = vmatpush1.xpose.msra.mxu0 0.0
        %957 = vmatprep.subr.mxu0 0.0
        %958 = vmatpush1.xpose.msra.mxu0 0.0
        %959 = vmatprep.subr.mxu0 0.0
        %960 = vmatpush1.xpose.msra.mxu0 0.0
        %961 = vmatprep.subr.mxu0 0.0
        %962 = vmatpush1.xpose.msra.mxu0 0.0
        %963 = vmatprep.subr.mxu0 0.0
        %964 = vmatpush1.xpose.msra.mxu0 0.0
        %965 = vmatprep.subr.mxu0 0.0
        %966 = vmatpush1.xpose.msra.mxu0 0.0
        %967 = vmatprep.subr.mxu0 0.0
        %968 = vmatpush1.xpose.msra.mxu0 0.0
        %969 = vmatprep.subr.mxu0 0.0
        %970 = vmatpush1.xpose.msra.mxu0 0.0
        %971 = vmatprep.subr.mxu0 0.0
        %972 = vmatpush1.xpose.msra.mxu0 0.0
        %973 = vmatprep.subr.mxu0 0.0
        %974 = vmatpush1.xpose.msra.mxu0 0.0
        %975 = vmatprep.subr.mxu0 0.0
        %976 = vmatpush1.xpose.msra.mxu0 0.0
        %977 = vmatprep.subr.mxu0 0.0
        %978 = vmatpush1.xpose.msra.mxu0 0.0
        %979 = vmatprep.subr.mxu0 0.0
        %980 = vmatpush1.xpose.msra.mxu0 0.0
        %981 = vmatprep.subr.mxu0 0.0
        %982 = vmatpush1.xpose.msra.mxu0 0.0
        %983 = vmatprep.subr.mxu0 0.0
        %984 = vmatpush1.xpose.msra.mxu0 0.0
        %985 = vmatprep.subr.mxu0 0.0
        %986 = vmatpush1.xpose.msra.mxu0 0.0
        %987 = vmatprep.mubr.f32.mxu0 0.0
        %988 = vmatmul.mubr.f32.gmra.mrb[0].mxu0 %v915
        %v989 = vpop.f32.mrb[0].mxu0
        %v990 = vadd.f32 0.0, %v989
        %v991 = vpop.f32.mrb[0].mxu0
        %992 = vmatprep.mubr.f32.mxu0 0.0
        %993 = vmatmul.mubr.f32.gmra.mrb[0].mxu0 %v917
        %v994 = vpop.f32.mrb[0].mxu0
        %v995 = vadd.f32 0.0, %v994
        %v996 = vpop.f32.mrb[0].mxu0
        %997 = vdwg.mxu0
        %v998 = vmul.f32 %v990, 0.35355338
        %v999 = vmul.f32 %v995, 0.35355338
        %v1000 = vsel %vm689, %v998, -inf
        %1001 = vmax.xlane.f32.xlu0 %v1000
        %v1002 = vpop.xlane.xlu0 %1001
        %v1003 = vsel %vm689, %v999, -inf
        %1004 = vmax.xlane.f32.xlu0 %v1003
        %v1005 = vpop.xlane.xlu0 %1004
        %v1006 = vsub.f32 %v998, %v1002
        %v1007 = vsub.f32 %v999, %v1005
        %v1008 = vmul.f32 %v1006, 1.442695
        %v1009 = vpow.pop %v1008
        %v1010 = vmul.f32 %v1007, 1.442695
        %v1011 = vpow.pop %v1010
        %v1012 = vsel %vm689, %v1009, 0.0
        %1013 = vadd.xlane.f32.xlu0 %v1012
        %v1014 = vpop.xlane.xlu0 %1013
        %v1015 = vsel %vm689, %v1011, 0.0
        %1016 = vadd.xlane.f32.xlu0 %v1015
        %v1017 = vpop.xlane.xlu0 %1016
        %v1018 = vrcp.pop %v1014
        %v1019 = vmul.f32 1.0, %v1018
        %v1020 = vrcp.pop %v1017
        %v1021 = vmul.f32 1.0, %v1020
        %v1022 = vmul.f32 %v1009, %v716
        %v1023 = vmul.f32 %v1011, %v716
        %v1024 = vsel %vm689, %v1022, 0.0
        %1025 = vadd.xlane.f32.xlu0 %v1024
        %v1026 = vpop.xlane.xlu0 %1025
        %v1027 = vsel %vm689, %v1023, 0.0
        %1028 = vadd.xlane.f32.xlu0 %v1027
        %v1029 = vpop.xlane.xlu0 %1028
        %v1030 = vmul.f32 %v1019, %v1026
        %v1031 = vmul.f32 %v1021, %v1029
        %v1032 = vmul.f32 %v597, %v1019
        %v1033 = vmul.f32 %v598, %v1021
        %1035 = vset.pattern.permute.xlu0 0
        %1036 = vperm.xlu0 %1035, %v1032
        %v1037 = vpop.permute.xlu0 %1036
        %1040 = vset.pattern.permute.xlu0 0
        %1041 = vperm.xlu0 %1040, %v1033
        %v1042 = vpop.permute.xlu0 %1041
        %v1044 = vmul.f32 %v1009, %v1037
        %v1045 = vmul.f32 %v1011, %v1042
        %v1046 = vsel %vm689, %v1044, 0.0
        %v1047 = vsel %vm689, %v1045, 0.0
        %v1048 = vadd.f32 %v1046, %v1047
        %v1049 = vrot.slane %v1048, 4
        %v1050 = vadd.f32 %v1048, %v1049
        %v1051 = vrot.slane %v1050, 2
        %v1052 = vadd.f32 %v1050, %v1051
        %v1053 = vrot.slane %v1052, 1
        %v1054 = vadd.f32 %v1052, %v1053
        %v1055 = vmul.f32 %v1030, %v1054
        %v1056 = vmul.f32 %v1031, %v1054
        %v1057 = vadd.f32 %v905, %v1055
        %v1058 = vadd.f32 %v906, %v1056
        %1059 = vrot.lane.b32.xlu0 %v501, 104
        %v1060 = vpop.permute.xlu0 %1059
        %1061 = vrot.lane.b32.xlu0 %v506, 104
        %v1062 = vpop.permute.xlu0 %1061
        %1063 = vrot.lane.b32.xlu0 %v588, 104
        %v1064 = vpop.permute.xlu0 %1063
        %1065 = vrot.lane.b32.xlu0 %v593, 104
        %v1066 = vpop.permute.xlu0 %1065
        %v1067 = vsel %vm599, %v1060, 0
        %v1069 = vsel %vm599, %v1062, 0
        %v1071 = vsel %vm599, %v1064, 0
        %v1073 = vsel %vm599, %v1066, 0
        %1075 = vmatprep.subr.mxu0 0.0
        %1076 = vmatpush1.xpose.msra.mxu0 %v1071
        %1077 = vmatprep.subr.mxu0 0.0
        %1078 = vmatpush1.xpose.msra.mxu0 %v1073
        %1079 = vmatprep.subr.mxu0 0.0
        %1080 = vmatpush1.xpose.msra.mxu0 0.0
        %1081 = vmatprep.subr.mxu0 0.0
        %1082 = vmatpush1.xpose.msra.mxu0 0.0
        %1083 = vmatprep.subr.mxu0 0.0
        %1084 = vmatpush1.xpose.msra.mxu0 0.0
        %1085 = vmatprep.subr.mxu0 0.0
        %1086 = vmatpush1.xpose.msra.mxu0 0.0
        %1087 = vmatprep.subr.mxu0 0.0
        %1088 = vmatpush1.xpose.msra.mxu0 0.0
        %1089 = vmatprep.subr.mxu0 0.0
        %1090 = vmatpush1.xpose.msra.mxu0 0.0
        %1091 = vmatprep.subr.mxu0 0.0
        %1092 = vmatpush1.xpose.msra.mxu0 0.0
        %1093 = vmatprep.subr.mxu0 0.0
        %1094 = vmatpush1.xpose.msra.mxu0 0.0
        %1095 = vmatprep.subr.mxu0 0.0
        %1096 = vmatpush1.xpose.msra.mxu0 0.0
        %1097 = vmatprep.subr.mxu0 0.0
        %1098 = vmatpush1.xpose.msra.mxu0 0.0
        %1099 = vmatprep.subr.mxu0 0.0
        %1100 = vmatpush1.xpose.msra.mxu0 0.0
        %1101 = vmatprep.subr.mxu0 0.0
        %1102 = vmatpush1.xpose.msra.mxu0 0.0
        %1103 = vmatprep.subr.mxu0 0.0
        %1104 = vmatpush1.xpose.msra.mxu0 0.0
        %1105 = vmatprep.subr.mxu0 0.0
        %1106 = vmatpush1.xpose.msra.mxu0 0.0
        %1107 = vmatprep.subr.mxu0 0.0
        %1108 = vmatpush1.xpose.msra.mxu0 0.0
        %1109 = vmatprep.subr.mxu0 0.0
        %1110 = vmatpush1.xpose.msra.mxu0 0.0
        %1111 = vmatprep.subr.mxu0 0.0
        %1112 = vmatpush1.xpose.msra.mxu0 0.0
        %1113 = vmatprep.subr.mxu0 0.0
        %1114 = vmatpush1.xpose.msra.mxu0 0.0
        %1115 = vmatprep.subr.mxu0 0.0
        %1116 = vmatpush1.xpose.msra.mxu0 0.0
        %1117 = vmatprep.subr.mxu0 0.0
        %1118 = vmatpush1.xpose.msra.mxu0 0.0
        %1119 = vmatprep.subr.mxu0 0.0
        %1120 = vmatpush1.xpose.msra.mxu0 0.0
        %1121 = vmatprep.subr.mxu0 0.0
        %1122 = vmatpush1.xpose.msra.mxu0 0.0
        %1123 = vmatprep.subr.mxu0 0.0
        %1124 = vmatpush1.xpose.msra.mxu0 0.0
        %1125 = vmatprep.subr.mxu0 0.0
        %1126 = vmatpush1.xpose.msra.mxu0 0.0
        %1127 = vmatprep.subr.mxu0 0.0
        %1128 = vmatpush1.xpose.msra.mxu0 0.0
        %1129 = vmatprep.subr.mxu0 0.0
        %1130 = vmatpush1.xpose.msra.mxu0 0.0
        %1131 = vmatprep.subr.mxu0 0.0
        %1132 = vmatpush1.xpose.msra.mxu0 0.0
        %1133 = vmatprep.subr.mxu0 0.0
        %1134 = vmatpush1.xpose.msra.mxu0 0.0
        %1135 = vmatprep.subr.mxu0 0.0
        %1136 = vmatpush1.xpose.msra.mxu0 0.0
        %1137 = vmatprep.subr.mxu0 0.0
        %1138 = vmatpush1.xpose.msra.mxu0 0.0
        %1139 = vmatprep.mubr.f32.mxu0 0.0
        %1140 = vmatmul.mubr.f32.gmra.mrb[0].mxu0 %v1067
        %v1141 = vpop.f32.mrb[0].mxu0
        %v1142 = vadd.f32 0.0, %v1141
        %v1143 = vpop.f32.mrb[0].mxu0
        %1144 = vmatprep.mubr.f32.mxu0 0.0
        %1145 = vmatmul.mubr.f32.gmra.mrb[0].mxu0 %v1069
        %v1146 = vpop.f32.mrb[0].mxu0
        %v1147 = vadd.f32 0.0, %v1146
        %v1148 = vpop.f32.mrb[0].mxu0
        %1149 = vdwg.mxu0
        %v1150 = vmul.f32 %v1142, 0.35355338
        %v1151 = vmul.f32 %v1147, 0.35355338
        %v1152 = vsel %vm689, %v1150, -inf
        %1153 = vmax.xlane.f32.xlu0 %v1152
        %v1154 = vpop.xlane.xlu0 %1153
        %v1155 = vsel %vm689, %v1151, -inf
        %1156 = vmax.xlane.f32.xlu0 %v1155
        %v1157 = vpop.xlane.xlu0 %1156
        %v1158 = vsub.f32 %v1150, %v1154
        %v1159 = vsub.f32 %v1151, %v1157
        %v1160 = vmul.f32 %v1158, 1.442695
        %v1161 = vpow.pop %v1160
        %v1162 = vmul.f32 %v1159, 1.442695
        %v1163 = vpow.pop %v1162
        %v1164 = vsel %vm689, %v1161, 0.0
        %1165 = vadd.xlane.f32.xlu0 %v1164
        %v1166 = vpop.xlane.xlu0 %1165
        %v1167 = vsel %vm689, %v1163, 0.0
        %1168 = vadd.xlane.f32.xlu0 %v1167
        %v1169 = vpop.xlane.xlu0 %1168
        %v1170 = vrcp.pop %v1166
        %v1171 = vmul.f32 1.0, %v1170
        %v1172 = vrcp.pop %v1169
        %v1173 = vmul.f32 1.0, %v1172
        %v1174 = vmul.f32 %v1161, %v716
        %v1175 = vmul.f32 %v1163, %v716
        %v1176 = vsel %vm689, %v1174, 0.0
        %1177 = vadd.xlane.f32.xlu0 %v1176
        %v1178 = vpop.xlane.xlu0 %1177
        %v1179 = vsel %vm689, %v1175, 0.0
        %1180 = vadd.xlane.f32.xlu0 %v1179
        %v1181 = vpop.xlane.xlu0 %1180
        %v1182 = vmul.f32 %v1171, %v1178
        %v1183 = vmul.f32 %v1173, %v1181
        %v1184 = vmul.f32 %v597, %v1171
        %v1185 = vmul.f32 %v598, %v1173
        %1187 = vset.pattern.permute.xlu0 0
        %1188 = vperm.xlu0 %1187, %v1184
        %v1189 = vpop.permute.xlu0 %1188
        %1192 = vset.pattern.permute.xlu0 0
        %1193 = vperm.xlu0 %1192, %v1185
        %v1194 = vpop.permute.xlu0 %1193
        %v1196 = vmul.f32 %v1161, %v1189
        %v1197 = vmul.f32 %v1163, %v1194
        %v1198 = vsel %vm689, %v1196, 0.0
        %v1199 = vsel %vm689, %v1197, 0.0
        %v1200 = vadd.f32 %v1198, %v1199
        %v1201 = vrot.slane %v1200, 4
        %v1202 = vadd.f32 %v1200, %v1201
        %v1203 = vrot.slane %v1202, 2
        %v1204 = vadd.f32 %v1202, %v1203
        %v1205 = vrot.slane %v1204, 1
        %v1206 = vadd.f32 %v1204, %v1205
        %v1207 = vmul.f32 %v1182, %v1206
        %v1208 = vmul.f32 %v1183, %v1206
        %v1209 = vadd.f32 %v1057, %v1207
        %v1210 = vadd.f32 %v1058, %v1208
        %v1211 = vmul.f32 %v1209, 0.25
        %v1212 = vmul.f32 %v1210, 0.25
        %1213 = vst.msk [vmem:[%s393] sm:$0xff] %vm689, %v1211
        %1214 = vst.msk [vmem:[%s393 + $0x8] sm:$0xff] %vm689, %v1212
        %s1215 = sand.u32 %s222, 1
        %s1216 = scalar_lea.sflag [#allocation4], %s1215
        %s1217 = sand.u32 %s222, 1
        %s1218 = smul.addr %s1217, 16
        %s1219 = scalar_lea.vmem [#allocation8], %s1218
        // Predicated region
        $region65: #{tpu_custom_call.1} parent=51 // pred_check
          %p1220 = pneg %p232
        $region66: #{tpu_custom_call.1} parent=51 // pred_check_branch
          %1222 = sbr.rel (%p1220) target = $region68
        $region67: #{tpu_custom_call.1} parent=51 // pred_region
          %s1224 = ssub.s32 256, 256
          %1225 = vsyncadd %s1216, %s1224
          %s1226 = smul.addr %s26, 2
          %s1227 = smul.addr %s1226, 128
          %s1228 = scalar_lea.hbm %s8, %s1227
          %s1229 = sshll.u32 %s1219, 4
          %s1230 = int_to_ptr.vmem [resolvable:$true] %s1229
          %1235 = dma.vmem_to_hbm [thread:$0]  %s1230, 256, %s1228, %s1216, 128, 128, 8
        $region68: #{tpu_custom_call.1} parent=51 // pred_fallthru
          _
      $region52: #{tpu_custom_call.1} parent=5 // pred_fallthru
        _
      %p1236 = scmp.le.s32.totalorder 2, %s21
      // Predicated region
      $region69: #{tpu_custom_call.1} parent=5 // pred_check
        %p1237 = pneg %p1236
      $region70: #{tpu_custom_call.1} parent=5 // pred_check_branch
        %1239 = sbr.rel (%p1237) target = $region72
      $region71: #{tpu_custom_call.1} parent=5 // pred_region
        %s1240 = ssub.s32 %s21, 2
        // Predicated region
        $region73: #{tpu_custom_call.1} parent=71 // pred_check
          %p1241 = pneg %p238
        $region74: #{tpu_custom_call.1} parent=71 // pred_check_branch
          %1243 = sbr.rel (%p1241) target = $region76
        $region75: #{tpu_custom_call.1} parent=71 // pred_region
          %s1244 = sand.u32 %s223, 1
          %s1245 = scalar_lea.sflag [#allocation4], %s1244
          %s1246 = sand.u32 %s223, 1
          %s1247 = smul.addr %s1246, 16
          %s1248 = scalar_lea.vmem [#allocation8], %s1247
          %1249 = dma.done %s1245, 256
        $region76: #{tpu_custom_call.1} parent=71 // pred_fallthru
          _
      $region72: #{tpu_custom_call.1} parent=5 // pred_fallthru
        _
    $region6: #{tpu_custom_call.1} parent=1 // loop_footer
      %s25 = sadd.s32 1, %s21
    $region7: #{tpu_custom_call.1} parent=1 // loop_footer_branch
      %20 = sbr.rel target = $region3
    $region8: #{tpu_custom_call.1} parent=1 // loop_exit
      _
    %1250 = vsyncpa [#allocation3], 1
    %s1251 = scalar_lea.sflag [#allocation3], 1
    %1252 = vsyncpa %s1251, 1
    %1253 = vsyncpa [#allocation6], 1
    %1254 = vsyncpa [#allocation4], 1
    %s1255 = scalar_lea.sflag [#allocation4], 1
    %1256 = vsyncpa %s1255, 1

</llo_original>
